<compile_context>
chip_gen: v6e
topology: v6e:2x2x1
jax: 0.10.0
libtpu: 0.0.40
codegen_flags: <defaults>
</compile_context>

<pallas_src>
import functools

import jax
import jax.numpy as jnp
from jax.experimental import pallas as pl
from jax.experimental.pallas import tpu as pltpu


def _vmem_budget(block_bytes, scratch_bytes=0):
    """VMEM limit from the working set: double-buffered blocks + scratch + headroom,
    clamped so it never exceeds v7x's 64 MiB physical VMEM."""
    need = 2 * block_bytes + scratch_bytes + (8 << 20)
    return int(max(16 << 20, min(64 << 20, need)))


# ---------------------------------------------------------------------------
# Edge featurization kernel: distance -> Gaussian smearing -> [+flags] -> Linear
# ---------------------------------------------------------------------------

def _edge_feat_kernel(geo_ref, src_ref, dst_ref, off_ref, wg_ref, b_ref, out_ref,
                      *, coeff, n_nodes):
    Te = src_ref.shape[0]
    N2 = geo_ref.shape[0]                              # 2 * n_nodes

    # single two-hot mask per edge: row src (top half) + row (dst + N) (bottom half)
    lane = jax.lax.broadcasted_iota(jnp.int32, (Te, N2), 1)
    two_hot = jnp.logical_or(lane == src_ref[...],
                             lane == dst_ref[...] + n_nodes).astype(jnp.float32)

    # signed slab: rows [pos | is_mol*wsrc] and [-pos | is_mol*wdst]
    #   -> g = [pos_src - pos_dst | is_mol_src*wsrc + is_mol_dst*wdst]
    g = jnp.dot(two_hot, geo_ref[...], preferred_element_type=jnp.float32)   # (Te, 3+Ed)
    diff = g[:, 0:3]
    flag_proj = g[:, 3:]

    length = jnp.sqrt(jnp.sum(diff * diff, axis=-1, keepdims=True))          # (Te, 1)
    gauss = jnp.exp(coeff * (length - off_ref[...]) ** 2)                    # (Te, G)

    out = (jnp.dot(gauss, wg_ref[...], preferred_element_type=jnp.float32)
           + flag_proj + b_ref[...])
    out_ref[...] = out.astype(out_ref.dtype)


def edge_features(pos, is_mol, edge_index, edge_params, *,
                  cutoff, num_gauss, edge_dim, edge_tile):
    N = pos.shape[0]
    E = edge_index.shape[1]
    assert N % 8 == 0
    assert E % edge_tile == 0
    assert edge_tile % 128 == 0 or edge_tile == E
    T = E // edge_tile

    offsets = jnp.linspace(0.0, cutoff, num_gauss, dtype=jnp.float32).reshape(1, num_gauss)
    coeff = float(-0.5 / (cutoff / (num_gauss - 1)) ** 2)

    posf = pos.astype(jnp.float32)
    imol = is_mol.astype(jnp.float32).reshape(N, 1)
    # signed geo slab with the flag->edge_dim projection pre-folded (host side)
    geo = jnp.concatenate(
        [jnp.concatenate([posf, imol * edge_params["wsrc"]], axis=1),
         jnp.concatenate([-posf, imol * edge_params["wdst"]], axis=1)], axis=0)  # (2N, 3+Ed)

    src = edge_index[0].astype(jnp.int32).reshape(E, 1)
    dst = edge_index[1].astype(jnp.int32).reshape(E, 1)

    blk_bytes = (geo.size * 4 + 2 * edge_tile * 4 + num_gauss * 4
                 + num_gauss * edge_dim * 4 + edge_dim * 4
                 + edge_tile * edge_dim * 2)

    kern = functools.partial(_edge_feat_kernel, coeff=coeff, n_nodes=N)
    return pl.pallas_call(
        kern,
        out_shape=jax.ShapeDtypeStruct((E, edge_dim), jnp.bfloat16),
        grid=(T,),
        in_specs=[
            pl.BlockSpec((2 * N, 3 + edge_dim), lambda t: (0, 0)),
            pl.BlockSpec((edge_tile, 1), lambda t: (t, 0)),
            pl.BlockSpec((edge_tile, 1), lambda t: (t, 0)),
            pl.BlockSpec((1, num_gauss), lambda t: (0, 0)),
            pl.BlockSpec((num_gauss, edge_dim), lambda t: (0, 0)),
            pl.BlockSpec((1, edge_dim), lambda t: (0, 0)),
        ],
        out_specs=pl.BlockSpec((edge_tile, edge_dim), lambda t: (t, 0)),
        compiler_params=pltpu.CompilerParams(
            dimension_semantics=("parallel",),
            vmem_limit_bytes=_vmem_budget(blk_bytes)),
    )(geo, src, dst, offsets, edge_params["wg"], edge_params["b"])


# ---------------------------------------------------------------------------
# All NodeBlocks in one kernel: grid = (num_blocks, num_edge_tiles)
# ---------------------------------------------------------------------------

def _node_blocks_kernel(h0_ref, ea_ref, rowT_ref, col_ref,
                        ngslab, nb1, nw2, nb2,         # node_net MLP (+gate-x, +centroid)
                        eslab, eb1, ew2, eb2,          # edge_net MLP (+gate-edge)
                        mw, mb,                        # msg_net Linear
                        gb1, gw2, gb2,                 # gate MLP (first layer fused in slabs)
                        cb,                            # centroid_lin bias
                        lng, lnb,                      # layer_norm
                        ow, ob,                        # out_transform
                        out_ref,
                        h_s, rhs_s, aggr_s,
                        *, hidden, eps):
    blk = pl.program_id(0)
    t = pl.program_id(1)
    B = pl.num_programs(0)
    T = pl.num_programs(1)
    N = h0_ref.shape[0]
    Te = ea_ref.shape[0]
    H = hidden
    bf = jnp.bfloat16

    # --- initialize the residual carry once -------------------------------
    @pl.when(jnp.logical_and(blk == 0, t == 0))
    def _():
        h_s[...] = h0_ref[...]

    # --- per-block prologue (first edge tile): ONE fused (D, 3H) matmul ----
    @pl.when(t == 0)
    def _():
        hcb = h_s[...].astype(bf)                       # (N, D)
        pre = jnp.dot(hcb, ngslab[...], preferred_element_type=jnp.float32)  # (N, 3H)
        hn = jnp.maximum(pre[:, 0:H] + nb1[...], 0.0)
        hn = jnp.dot(hn.astype(bf), nw2[...], preferred_element_type=jnp.float32) + nb2[...]
        rhs_s[:, 0:H] = hn.astype(bf)                   # gather slab col block 0: node_net(h)
        rhs_s[:, H:2 * H] = pre[:, H:2 * H].astype(bf)  # gather slab col block 1: h @ gate_W1_x
        aggr_s[...] = pre[:, 2 * H:3 * H] + cb[...]     # centroid_lin folded into accumulator

    # --- per edge tile ------------------------------------------------------
    eab = ea_ref[...]                                   # (Te, Ed) bf16
    epre = jnp.dot(eab, eslab[...], preferred_element_type=jnp.float32)       # (Te, 2H)

    he = jnp.maximum(epre[:, 0:H] + eb1[...], 0.0)
    he = jnp.dot(he.astype(bf), ew2[...], preferred_element_type=jnp.float32) + eb2[...]

    # gather at destination `col`: single bf16 one-hot matmul over the fused slab
    lane = jax.lax.broadcasted_iota(jnp.int32, (Te, N), 1)
    col_oh = (lane == col_ref[...]).astype(bf)                                # (Te, N)
    gathered = jnp.dot(col_oh, rhs_s[...], preferred_element_type=jnp.float32)  # (Te, 2H)
    hn_col = gathered[:, 0:H]                           # node_net(h)[col]
    gx_col = gathered[:, H:2 * H]                       # (h @ gate_W1_x)[col]

    msg = jnp.dot((he * hn_col).astype(bf), mw[...],
                  preferred_element_type=jnp.float32) + mb[...]               # (Te, H)

    # gate( cat([edge_attr, x[col], node_time[col]]) ); node_time column dropped (zeros)
    gate = jnp.maximum(epre[:, H:2 * H] + gx_col + gb1[...], 0.0)
    gate = jnp.dot(gate.astype(bf), gw2[...], preferred_element_type=jnp.float32) + gb2[...]
    msg = msg * jax.nn.sigmoid(gate)

    # scatter_sum over source `row` into the VMEM accumulator
    sub = jax.lax.broadcasted_iota(jnp.int32, (N, Te), 0)
    row_oh = (sub == rowT_ref[...]).astype(bf)                                # (N, Te)
    aggr_s[...] += jnp.dot(row_oh, msg.astype(bf), preferred_element_type=jnp.float32)

    # --- finalize block (last edge tile): LN + out_transform + residual ----
    @pl.when(t == T - 1)
    def _():
        o = aggr_s[...]                                 # centroid_lin(x) + aggr_msg
        mu = jnp.mean(o, axis=-1, keepdims=True)
        var = jnp.mean((o - mu) ** 2, axis=-1, keepdims=True)
        o = (o - mu) * jax.lax.rsqrt(var + eps) * lng[...] + lnb[...]
        o = jnp.maximum(o, 0.0)
        o = jnp.dot(o.astype(bf), ow[...], preferred_element_type=jnp.float32) + ob[...]
        h_s[...] = h_s[...] + o                         # residual folded in-kernel

    # only the last block's result ever needs to reach HBM
    @pl.when(jnp.logical_and(t == T - 1, blk == B - 1))
    def _():
        out_ref[...] = h_s[...]


_WEIGHT_ORDER = ["ngslab", "nb1", "nw2", "nb2",
                 "eslab", "eb1", "ew2", "eb2",
                 "mw", "mb",
                 "gb1", "gw2", "gb2",
                 "cb", "lng", "lnb", "ow", "ob"]


def node_blocks_forward(h, edge_attr, edge_index, p, *, edge_tile, eps=1e-5):
    N, D = h.shape
    E = edge_index.shape[1]
    Ed = edge_attr.shape[1]
    B = p["nw1"].shape[0]
    H = p["nw1"].shape[2]
    assert N % 8 == 0
    assert E % edge_tile == 0
    assert edge_tile % 128 == 0 or edge_tile == E
    T = E // edge_tile

    rowT = edge_index[0].astype(jnp.int32).reshape(1, E)   # scatter index
    col = edge_index[1].astype(jnp.int32).reshape(E, 1)    # gather index

    # host-side shared-LHS slab fusions
    fused = dict(p)
    fused["ngslab"] = jnp.concatenate([p["nw1"], p["gw1x"], p["cw"]], axis=2)  # (B, D, 3H)
    fused["eslab"] = jnp.concatenate([p["ew1"], p["gw1e"]], axis=2)            # (B, Ed, 2H)
    weights = [fused[k] for k in _WEIGHT_ORDER]

    def w_spec(arr):
        # squeezed leading (per-block) dim -> 2-D kernel refs, no [0] indexing
        return pl.BlockSpec((None,) + arr.shape[1:], lambda b, t: (b, 0, 0))

    in_specs = [
        pl.BlockSpec((N, D), lambda b, t: (0, 0)),
        pl.BlockSpec((edge_tile, Ed), lambda b, t: (t, 0)),
        pl.BlockSpec((1, edge_tile), lambda b, t: (0, t)),
        pl.BlockSpec((edge_tile, 1), lambda b, t: (t, 0)),
    ] + [w_spec(w) for w in weights]

    blk_bytes = (N * D * 4                                   # h0 (resident)
                 + edge_tile * Ed * 2                        # edge_attr tile (bf16)
                 + 2 * edge_tile * 4                         # rowT + col tiles
                 + sum((w.size // w.shape[0]) * w.dtype.itemsize for w in weights)
                 + N * D * 4)                                # output
    scr_bytes = N * D * 4 + N * 2 * H * 2 + N * H * 4

    kern = functools.partial(_node_blocks_kernel, hidden=H, eps=eps)
    return pl.pallas_call(
        kern,
        out_shape=jax.ShapeDtypeStruct((N, D), jnp.float32),
        grid=(B, T),
        in_specs=in_specs,
        out_specs=pl.BlockSpec((N, D), lambda b, t: (0, 0)),
        scratch_shapes=[
            pltpu.VMEM((N, D), jnp.float32),       # residual carry h
            pltpu.VMEM((N, 2 * H), jnp.bfloat16),  # gather RHS slab [node_net(h) | h@gw1x]
            pltpu.VMEM((N, H), jnp.float32),       # scatter accumulator (+centroid)
        ],
        compiler_params=pltpu.CompilerParams(
            # both axes carry state (h_s / aggr_s) -> must stay sequential
            dimension_semantics=("arbitrary", "arbitrary"),
            vmem_limit_bytes=_vmem_budget(blk_bytes, scr_bytes)),
    )(h.astype(jnp.float32), edge_attr.astype(jnp.bfloat16), rowT, col, *weights)


def node_encoder_forward(h, pos, edge_index, is_mol, edge_params, block_params, *,
                         cutoff, num_gauss, edge_dim, edge_tile):
    edge_attr = edge_features(pos, is_mol, edge_index, edge_params,
                              cutoff=cutoff, num_gauss=num_gauss,
                              edge_dim=edge_dim, edge_tile=edge_tile)
    return node_blocks_forward(h, edge_attr, edge_index, block_params,
                               edge_tile=edge_tile)


# ---------------------------------------------------------------------------
# Parameters (weights stored bf16, biases / LN params f32)
# ---------------------------------------------------------------------------

def make_params(key, *, node_dim, edge_dim, hidden_dim, num_blocks, num_gauss, scale=0.1):
    def w(k, shape, dtype=jnp.bfloat16):
        return (scale * jax.random.normal(k, shape, jnp.float32)).astype(dtype)

    def bvec(k, shape):
        return 0.05 * jax.random.normal(k, shape, jnp.float32)

    ks = jax.random.split(key, 32)
    B, D, H, Ed = num_blocks, node_dim, hidden_dim, edge_dim

    edge_params = dict(
        wg=w(ks[0], (num_gauss, Ed), jnp.float32),
        wsrc=w(ks[1], (1, Ed), jnp.float32),
        wdst=w(ks[2], (1, Ed), jnp.float32),
        b=bvec(ks[3], (1, Ed)),
    )
    block_params = dict(
        nw1=w(ks[4], (B, D, H)), nb1=bvec(ks[5], (B, 1, H)),
        nw2=w(ks[6], (B, H, H)), nb2=bvec(ks[7], (B, 1, H)),
        ew1=w(ks[8], (B, Ed, H)), eb1=bvec(ks[9], (B, 1, H)),
        ew2=w(ks[10], (B, H, H)), eb2=bvec(ks[11], (B, 1, H)),
        mw=w(ks[12], (B, H, H)), mb=bvec(ks[13], (B, 1, H)),
        gw1e=w(ks[14], (B, Ed, H)), gw1x=w(ks[15], (B, D, H)), gb1=bvec(ks[16], (B, 1, H)),
        gw2=w(ks[17], (B, H, H)), gb2=bvec(ks[18], (B, 1, H)),
        cw=w(ks[19], (B, D, H)), cb=bvec(ks[20], (B, 1, H)),
        lng=jnp.ones((B, 1, H), jnp.float32), lnb=jnp.zeros((B, 1, H), jnp.float32),
        ow=w(ks[21], (B, H, D)), ob=bvec(ks[22], (B, 1, D)),
    )
    return edge_params, block_params


# ---------------------------------------------------------------------------
# Pure-JAX reference (mirrors the kernel's bf16-input / f32-accumulate matmuls)
# ---------------------------------------------------------------------------

def reference_forward(h, pos, edge_index, is_mol, edge_params, block_params, *,
                      cutoff, num_gauss, eps=1e-5):
    bf, f32 = jnp.bfloat16, jnp.float32
    src = edge_index[0]
    dst = edge_index[1]

    diff = pos[src] - pos[dst]
    length = jnp.sqrt(jnp.sum(diff * diff, axis=-1, keepdims=True))
    offsets = jnp.linspace(0.0, cutoff, num_gauss, dtype=f32)[None, :]
    coeff = -0.5 / (cutoff / (num_gauss - 1)) ** 2
    gauss = jnp.exp(coeff * (length - offsets) ** 2)
    sflag = is_mol[src].astype(f32)[:, None]
    dflag = is_mol[dst].astype(f32)[:, None]
    ea = (gauss @ edge_params["wg"] + sflag * edge_params["wsrc"]
          + dflag * edge_params["wdst"] + edge_params["b"])
    ea = ea.astype(bf).astype(f32)          # kernel emits bf16 edge_attr

    p = block_params
    B = p["nw1"].shape[0]
    N = h.shape[0]

    def mm(a, w_):
        return jnp.dot(a.astype(bf), w_, preferred_element_type=f32)

    x = h
    for bi in range(B):
        hn = jax.nn.relu(mm(x, p["nw1"][bi]) + p["nb1"][bi])
        hn = mm(hn, p["nw2"][bi]) + p["nb2"][bi]
        he = jax.nn.relu(mm(ea, p["ew1"][bi]) + p["eb1"][bi])
        he = mm(he, p["ew2"][bi]) + p["eb2"][bi]
        hn_col = hn.astype(bf).astype(f32)[dst]
        gx_col = mm(x, p["gw1x"][bi]).astype(bf).astype(f32)[dst]
        msg = mm(he * hn_col, p["mw"][bi]) + p["mb"][bi]
        gate = jax.nn.relu(mm(ea, p["gw1e"][bi]) + gx_col + p["gb1"][bi])
        gate = mm(gate, p["gw2"][bi]) + p["gb2"][bi]
        msg = (msg * jax.nn.sigmoid(gate)).astype(bf).astype(f32)
        aggr = jax.ops.segment_sum(msg, src, num_segments=N)
        out = mm(x, p["cw"][bi]) + p["cb"][bi] + aggr
        mu = out.mean(-1, keepdims=True)
        var = ((out - mu) ** 2).mean(-1, keepdims=True)
        out = (out - mu) * jax.lax.rsqrt(var + eps) * p["lng"][bi] + p["lnb"][bi]
        out = mm(jax.nn.relu(out), p["ow"][bi]) + p["ob"][bi]
        x = x + out
    return x


# ---------------------------------------------------------------------------
# Demo
# ---------------------------------------------------------------------------

if __name__ == "__main__":
    # small, lane-friendly config (module defaults shrunk: node_dim 256->128, 6->2 blocks)
    NODE_DIM, EDGE_DIM, HIDDEN, NUM_BLOCKS = 128, 64, 128, 2
    NUM_GAUSS, CUTOFF = 20, 10.0
    N, E, EDGE_TILE = 64, 512, 256

    key = jax.random.PRNGKey(0)
    k_h, k_pos, k_src, k_dst, k_mol, k_par = jax.random.split(key, 6)

    h = jax.random.normal(k_h, (N, NODE_DIM), jnp.float32)
    pos = 3.0 * jax.random.normal(k_pos, (N, 3), jnp.float32)
    src = jax.random.randint(k_src, (E,), 0, N, jnp.int32)
    dst = jax.random.randint(k_dst, (E,), 0, N, jnp.int32)
    edge_index = jnp.stack([src, dst], axis=0)            # (2, E)
    is_mol = jax.random.bernoulli(k_mol, 0.5, (N,))

    edge_params, block_params = make_params(
        k_par, node_dim=NODE_DIM, edge_dim=EDGE_DIM, hidden_dim=HIDDEN,
        num_blocks=NUM_BLOCKS, num_gauss=NUM_GAUSS)

    out = node_encoder_forward(h, pos, edge_index, is_mol,
                               edge_params, block_params,
                               cutoff=CUTOFF, num_gauss=NUM_GAUSS,
                               edge_dim=EDGE_DIM, edge_tile=EDGE_TILE)
    out = jax.block_until_ready(out)

    ref = reference_forward(h, pos, edge_index, is_mol, edge_params, block_params,
                            cutoff=CUTOFF, num_gauss=NUM_GAUSS)
    max_err = float(jnp.max(jnp.abs(out - ref)))

    assert out.shape == (N, NODE_DIM)
    assert bool(jnp.all(jnp.isfinite(out)))
    assert max_err < 5e-2, f"max abs err vs reference: {max_err}"
    print("KERNEL_OK")
</pallas_src>

<mosaic_0001>
module attributes {stable_mosaic.version = 11 : i64} {
  func.func @_edge_feat_kernel(%arg0: i32, %arg1: memref<128x67xf32, #tpu.memory_space<vmem>>, %arg2: memref<256x1xi32, #tpu.memory_space<vmem>>, %arg3: memref<256x1xi32, #tpu.memory_space<vmem>>, %arg4: memref<1x20xf32, #tpu.memory_space<vmem>>, %arg5: memref<20x64xf32, #tpu.memory_space<vmem>>, %arg6: memref<1x64xf32, #tpu.memory_space<vmem>>, %arg7: memref<256x64xbf16, #tpu.memory_space<vmem>>) attributes {dimension_semantics = [#tpu.dimension_semantics<parallel>], iteration_bounds = array<i64: 2>, scalar_prefetch = 0 : i64, scratch_operands = 0 : i64, tpu.core_type = #tpu.core_type<tc>, window_params = [{pipeline_mode = #tpu.pipeline_mode<synchronous>, transform_indices = @transform_0, window_bounds = array<i64: 128, 67>}, {transform_indices = @transform_1, window_bounds = array<i64: 256, 1>}, {transform_indices = @transform_2, window_bounds = array<i64: 256, 1>}, {pipeline_mode = #tpu.pipeline_mode<synchronous>, transform_indices = @transform_3, window_bounds = array<i64: 1, 20>}, {pipeline_mode = #tpu.pipeline_mode<synchronous>, transform_indices = @transform_4, window_bounds = array<i64: 20, 64>}, {pipeline_mode = #tpu.pipeline_mode<synchronous>, transform_indices = @transform_5, window_bounds = array<i64: 1, 64>}, {transform_indices = @transform_6, window_bounds = array<i64: 256, 64>}]} {
    %0 = tpu.iota {dimensions = array<i32: 1>} : vector<256x128xi32>
    %c0 = arith.constant 0 : index
    %c0_0 = arith.constant 0 : index
    %1 = vector.load %arg2[%c0, %c0_0] : memref<256x1xi32, #tpu.memory_space<vmem>>, vector<256x1xi32>
    %2 = vector.broadcast %1 : vector<256x1xi32> to vector<256x128xi32>
    %3 = arith.cmpi eq, %0, %2 : vector<256x128xi32>
    %c0_1 = arith.constant 0 : index
    %c0_2 = arith.constant 0 : index
    %4 = vector.load %arg3[%c0_1, %c0_2] : memref<256x1xi32, #tpu.memory_space<vmem>>, vector<256x1xi32>
    %c64_i32 = arith.constant 64 : i32
    %5 = vector.broadcast %c64_i32 : i32 to vector<256x1xi32>
    %6 = arith.addi %4, %5 : vector<256x1xi32>
    %7 = vector.broadcast %6 : vector<256x1xi32> to vector<256x128xi32>
    %8 = arith.cmpi eq, %0, %7 : vector<256x128xi32>
    %9 = arith.ori %3, %8 : vector<256x128xi1>
    %10 = arith.extui %9 : vector<256x128xi1> to vector<256x128xi32>
    %11 = arith.sitofp %10 : vector<256x128xi32> to vector<256x128xf32>
    %c0_3 = arith.constant 0 : index
    %c0_4 = arith.constant 0 : index
    %12 = vector.load %arg1[%c0_3, %c0_4] : memref<128x67xf32, #tpu.memory_space<vmem>>, vector<128x67xf32>
    %cst = arith.constant dense<0.000000e+00> : vector<256x67xf32>
    %13 = tpu.matmul %11, %12, %cst {dimension_numbers = #tpu.dot_dimension_numbers<[1], [0], [0], [1], [0, 0, 1, 1], [], []>} : vector<256x128xf32>, vector<128x67xf32>, vector<256x67xf32> -> vector<256x67xf32>
    %14 = vector.extract_strided_slice %13 {offsets = [0, 0], sizes = [256, 3], strides = [1, 1]} : vector<256x67xf32> to vector<256x3xf32>
    %15 = vector.extract_strided_slice %13 {offsets = [0, 3], sizes = [256, 64], strides = [1, 1]} : vector<256x67xf32> to vector<256x64xf32>
    %16 = arith.mulf %14, %14 : vector<256x3xf32>
    %cst_5 = arith.constant dense<0.000000e+00> : vector<256xf32>
    %17 = vector.multi_reduction <add>, %16, %cst_5 [1] : vector<256x3xf32> to vector<256xf32>
    %18 = vector.shape_cast %17 : vector<256xf32> to vector<256x1xf32>
    %19 = math.sqrt %18 : vector<256x1xf32>
    %c0_6 = arith.constant 0 : index
    %c0_7 = arith.constant 0 : index
    %20 = vector.load %arg4[%c0_6, %c0_7] : memref<1x20xf32, #tpu.memory_space<vmem>>, vector<1x20xf32>
    %21 = vector.broadcast %19 : vector<256x1xf32> to vector<256x20xf32>
    %22 = vector.broadcast %20 : vector<1x20xf32> to vector<256x20xf32>
    %23 = arith.subf %21, %22 : vector<256x20xf32>
    %24 = arith.mulf %23, %23 : vector<256x20xf32>
    %cst_8 = arith.constant -1.805000e+00 : f32
    %25 = vector.broadcast %cst_8 : f32 to vector<256x20xf32>
    %26 = arith.mulf %25, %24 : vector<256x20xf32>
    %27 = math.exp %26 : vector<256x20xf32>
    %c0_9 = arith.constant 0 : index
    %c0_10 = arith.constant 0 : index
    %28 = vector.load %arg5[%c0_9, %c0_10] : memref<20x64xf32, #tpu.memory_space<vmem>>, vector<20x64xf32>
    %cst_11 = arith.constant dense<0.000000e+00> : vector<256x64xf32>
    %29 = tpu.matmul %27, %28, %cst_11 {dimension_numbers = #tpu.dot_dimension_numbers<[1], [0], [0], [1], [0, 0, 1, 1], [], []>} : vector<256x20xf32>, vector<20x64xf32>, vector<256x64xf32> -> vector<256x64xf32>
    %30 = arith.addf %29, %15 : vector<256x64xf32>
    %c0_12 = arith.constant 0 : index
    %c0_13 = arith.constant 0 : index
    %31 = vector.load %arg6[%c0_12, %c0_13] : memref<1x64xf32, #tpu.memory_space<vmem>>, vector<1x64xf32>
    %32 = vector.broadcast %31 : vector<1x64xf32> to vector<256x64xf32>
    %33 = arith.addf %30, %32 : vector<256x64xf32>
    %34 = arith.truncf %33 : vector<256x64xf32> to vector<256x64xbf16>
    %c0_14 = arith.constant 0 : index
    %c0_15 = arith.constant 0 : index
    %35 = vector.load %arg7[%c0_14, %c0_15] : memref<256x64xbf16, #tpu.memory_space<vmem>>, vector<256x64xbf16>
    tpu.vector_store %arg7[%c0_14, %c0_15], %34 {strides = array<i32>} : memref<256x64xbf16, #tpu.memory_space<vmem>>, vector<256x64xbf16>,
    return
  }
  func.func @transform_0(%arg0: i32) -> (i32, i32) {
    %c0_i32 = arith.constant 0 : i32
    %c0_i32_0 = arith.constant 0 : i32
    %c0_i32_1 = arith.constant 0 : i32
    return %c0_i32, %c0_i32_0 : i32, i32
  }
  func.func @transform_1(%arg0: i32) -> (i32, i32) {
    %c0_i32 = arith.constant 0 : i32
    %c0_i32_0 = arith.constant 0 : i32
    return %arg0, %c0_i32 : i32, i32
  }
  func.func @transform_2(%arg0: i32) -> (i32, i32) {
    %c0_i32 = arith.constant 0 : i32
    %c0_i32_0 = arith.constant 0 : i32
    return %arg0, %c0_i32 : i32, i32
  }
  func.func @transform_3(%arg0: i32) -> (i32, i32) {
    %c0_i32 = arith.constant 0 : i32
    %c0_i32_0 = arith.constant 0 : i32
    %c0_i32_1 = arith.constant 0 : i32
    return %c0_i32, %c0_i32_0 : i32, i32
  }
  func.func @transform_4(%arg0: i32) -> (i32, i32) {
    %c0_i32 = arith.constant 0 : i32
    %c0_i32_0 = arith.constant 0 : i32
    %c0_i32_1 = arith.constant 0 : i32
    return %c0_i32, %c0_i32_0 : i32, i32
  }
  func.func @transform_5(%arg0: i32) -> (i32, i32) {
    %c0_i32 = arith.constant 0 : i32
    %c0_i32_0 = arith.constant 0 : i32
    %c0_i32_1 = arith.constant 0 : i32
    return %c0_i32, %c0_i32_0 : i32, i32
  }
  func.func @transform_6(%arg0: i32) -> (i32, i32) {
    %c0_i32 = arith.constant 0 : i32
    %c0_i32_0 = arith.constant 0 : i32
    return %arg0, %c0_i32 : i32, i32
  }
}

</mosaic_0001>

<llo_original>
// kernel: tpu_custom_call.1
$region0: #{tpu_custom_call.1}
  #allocation0 [shape = 'u32[]', space=smem, size = 0x4, offset = 0x4, fixed_abs, tag = 'smem constant byte address 0x4 - core index']
  #allocation1 [shape = 'u32[144,128]{1,0:T(1,128)}', space=vmem, size = 0x12000, scoped, tag = 'internal scratch']
  %s0 = inlined_call_operand.vmem [shape: f32[128,67], index: 0, kind: input, shape index: {}]
  %s1 = inlined_call_operand.vmem [shape: s32[512,1], index: 1, kind: input, shape index: {}]
  %s2 = inlined_call_operand.vmem [shape: s32[512,1], index: 2, kind: input, shape index: {}]
  %s3 = inlined_call_operand.vmem [shape: f32[1,20], index: 3, kind: input, shape index: {}]
  %s4 = inlined_call_operand.vmem [shape: f32[20,64], index: 4, kind: input, shape index: {}]
  %s5 = inlined_call_operand.vmem [shape: f32[1,64], index: 5, kind: input, shape index: {}]
  %s6 = inlined_call_operand.vmem [shape: bf16[512,64], index: 6, kind: output, shape index: {}]
  %s7 = sld [smem:[#allocation0]]
  $region57: #{tpu_custom_call.1} parent=0
    _
  %s9 = ssub.s32 1, %s7
  %s10 = scalar_select 0, %s9, %s7
  loop: start=0, step=1, limit=4
  $region2: #{tpu_custom_call.1} parent=0 // loop_pre_header
    _
  $region3: #{tpu_custom_call.1} parent=0 // loop_header
    %s12 = sphi 0, %s16
    %p13 = scmp.ge.s32.totalorder %s12, 4
    %s20 = sphi 0, %s20
    %s22 = sphi 0, %s20
    %s23 = sphi 0, %s22
    %s37 = sphi 0, %s23
    %s43 = sphi 0, %s45
    %s46 = sphi 0, %s43
    %s47 = sphi 0, %s46
    %s63 = sphi 0, %s47
    %s69 = sphi 0, %s71
    %s72 = sphi 0, %s69
    %s73 = sphi 0, %s72
    %s89 = sphi 0, %s73
    %s93 = sphi 0, %s93
    %s95 = sphi 0, %s93
    %s96 = sphi 0, %s95
    %s110 = sphi 0, %s96
    %s114 = sphi 0, %s114
    %s116 = sphi 0, %s114
    %s117 = sphi 0, %s116
    %s131 = sphi 0, %s117
    %s135 = sphi 0, %s135
    %s137 = sphi 0, %s135
    %s138 = sphi 0, %s137
    %s152 = sphi 0, %s138
    %s158 = sphi 0, %s160
    %s161 = sphi 0, %s158
    %s162 = sphi 0, %s161
    %s178 = sphi 0, %s162
  $region4: #{tpu_custom_call.1} parent=0 // loop_header_branch
    %15 = sbr.rel (%p13) target = $region8
  $region5: #{tpu_custom_call.1} parent=0 // loop_body
    %s17 = ssub.s32 %s12, 1
    %s18 = ssub.s32 %s12, 2
    %s19 = sadd.s32 %s12, 1
    %s21 = sadd.s32 %s20, 1
    %p24 = scmp.eq.s32.totalorder %s12, 1
    %p25 = scmp.ne.s32.totalorder %s20, %s22
    %p26 = scmp.eq.s32.totalorder %s12, 0
    %p27 = por %p25, %p26
    %p28 = scmp.ne.s32.totalorder %s20, %s22
    %p29 = scmp.eq.s32.totalorder %s17, 1
    %p30 = por %p28, %p29
    %p31 = scmp.ne.s32.totalorder %s22, %s23
    %p32 = scmp.eq.s32.totalorder %s17, 0
    %p33 = por %p31, %p32
    %p34 = scmp.ne.s32.totalorder %s22, %s23
    %p35 = scmp.eq.s32.totalorder %s18, 1
    %p36 = por %p34, %p35
    %p38 = scmp.ne.s32.totalorder %s23, %s37
    %p39 = scmp.eq.s32.totalorder %s18, 0
    %p40 = por %p38, %p39
    %s41 = ssub.s32 %s12, %s19
    %p42 = scmp.eq.s32.totalorder %s41, 0
    %s44 = sadd.s32 %s43, 1
    %s45 = scalar_select %p42, %s43, %s44
    %p48 = pneg %p42
    %p49 = scmp.eq.s32.totalorder %s12, 1
    %p50 = por %p48, %p49
    %p51 = scmp.ne.s32.totalorder %s43, %s46
    %p52 = scmp.eq.s32.totalorder %s12, 0
    %p53 = por %p51, %p52
    %p54 = scmp.ne.s32.totalorder %s43, %s46
    %p55 = scmp.eq.s32.totalorder %s17, 1
    %p56 = por %p54, %p55
    %p57 = scmp.ne.s32.totalorder %s46, %s47
    %p58 = scmp.eq.s32.totalorder %s17, 0
    %p59 = por %p57, %p58
    %p60 = scmp.ne.s32.totalorder %s46, %s47
    %p61 = scmp.eq.s32.totalorder %s18, 1
    %p62 = por %p60, %p61
    %p64 = scmp.ne.s32.totalorder %s47, %s63
    %p65 = scmp.eq.s32.totalorder %s18, 0
    %p66 = por %p64, %p65
    %s67 = ssub.s32 %s12, %s19
    %p68 = scmp.eq.s32.totalorder %s67, 0
    %s70 = sadd.s32 %s69, 1
    %s71 = scalar_select %p68, %s69, %s70
    %p74 = pneg %p68
    %p75 = scmp.eq.s32.totalorder %s12, 1
    %p76 = por %p74, %p75
    %p77 = scmp.ne.s32.totalorder %s69, %s72
    %p78 = scmp.eq.s32.totalorder %s12, 0
    %p79 = por %p77, %p78
    %p80 = scmp.ne.s32.totalorder %s69, %s72
    %p81 = scmp.eq.s32.totalorder %s17, 1
    %p82 = por %p80, %p81
    %p83 = scmp.ne.s32.totalorder %s72, %s73
    %p84 = scmp.eq.s32.totalorder %s17, 0
    %p85 = por %p83, %p84
    %p86 = scmp.ne.s32.totalorder %s72, %s73
    %p87 = scmp.eq.s32.totalorder %s18, 1
    %p88 = por %p86, %p87
    %p90 = scmp.ne.s32.totalorder %s73, %s89
    %p91 = scmp.eq.s32.totalorder %s18, 0
    %p92 = por %p90, %p91
    %s94 = sadd.s32 %s93, 1
    %p97 = scmp.eq.s32.totalorder %s12, 1
    %p98 = scmp.ne.s32.totalorder %s93, %s95
    %p99 = scmp.eq.s32.totalorder %s12, 0
    %p100 = por %p98, %p99
    %p101 = scmp.ne.s32.totalorder %s93, %s95
    %p102 = scmp.eq.s32.totalorder %s17, 1
    %p103 = por %p101, %p102
    %p104 = scmp.ne.s32.totalorder %s95, %s96
    %p105 = scmp.eq.s32.totalorder %s17, 0
    %p106 = por %p104, %p105
    %p107 = scmp.ne.s32.totalorder %s95, %s96
    %p108 = scmp.eq.s32.totalorder %s18, 1
    %p109 = por %p107, %p108
    %p111 = scmp.ne.s32.totalorder %s96, %s110
    %p112 = scmp.eq.s32.totalorder %s18, 0
    %p113 = por %p111, %p112
    %s115 = sadd.s32 %s114, 1
    %p118 = scmp.eq.s32.totalorder %s12, 1
    %p119 = scmp.ne.s32.totalorder %s114, %s116
    %p120 = scmp.eq.s32.totalorder %s12, 0
    %p121 = por %p119, %p120
    %p122 = scmp.ne.s32.totalorder %s114, %s116
    %p123 = scmp.eq.s32.totalorder %s17, 1
    %p124 = por %p122, %p123
    %p125 = scmp.ne.s32.totalorder %s116, %s117
    %p126 = scmp.eq.s32.totalorder %s17, 0
    %p127 = por %p125, %p126
    %p128 = scmp.ne.s32.totalorder %s116, %s117
    %p129 = scmp.eq.s32.totalorder %s18, 1
    %p130 = por %p128, %p129
    %p132 = scmp.ne.s32.totalorder %s117, %s131
    %p133 = scmp.eq.s32.totalorder %s18, 0
    %p134 = por %p132, %p133
    %s136 = sadd.s32 %s135, 1
    %p139 = scmp.eq.s32.totalorder %s12, 1
    %p140 = scmp.ne.s32.totalorder %s135, %s137
    %p141 = scmp.eq.s32.totalorder %s12, 0
    %p142 = por %p140, %p141
    %p143 = scmp.ne.s32.totalorder %s135, %s137
    %p144 = scmp.eq.s32.totalorder %s17, 1
    %p145 = por %p143, %p144
    %p146 = scmp.ne.s32.totalorder %s137, %s138
    %p147 = scmp.eq.s32.totalorder %s17, 0
    %p148 = por %p146, %p147
    %p149 = scmp.ne.s32.totalorder %s137, %s138
    %p150 = scmp.eq.s32.totalorder %s18, 1
    %p151 = por %p149, %p150
    %p153 = scmp.ne.s32.totalorder %s138, %s152
    %p154 = scmp.eq.s32.totalorder %s18, 0
    %p155 = por %p153, %p154
    %s156 = ssub.s32 %s12, %s19
    %p157 = scmp.eq.s32.totalorder %s156, 0
    %s159 = sadd.s32 %s158, 1
    %s160 = scalar_select %p157, %s158, %s159
    %p163 = pneg %p157
    %p164 = scmp.eq.s32.totalorder %s12, 1
    %p165 = por %p163, %p164
    %p166 = scmp.ne.s32.totalorder %s158, %s161
    %p167 = scmp.eq.s32.totalorder %s12, 0
    %p168 = por %p166, %p167
    %p169 = scmp.ne.s32.totalorder %s158, %s161
    %p170 = scmp.eq.s32.totalorder %s17, 1
    %p171 = por %p169, %p170
    %p172 = scmp.ne.s32.totalorder %s161, %s162
    %p173 = scmp.eq.s32.totalorder %s17, 0
    %p174 = por %p172, %p173
    %p175 = scmp.ne.s32.totalorder %s161, %s162
    %p176 = scmp.eq.s32.totalorder %s18, 1
    %p177 = por %p175, %p176
    %p179 = scmp.ne.s32.totalorder %s162, %s178
    %p180 = scmp.eq.s32.totalorder %s18, 0
    %p181 = por %p179, %p180
    %p182 = scmp.le.s32.totalorder 1, %s12
    %p183 = scmp.lt.s32.totalorder %s12, 3
    %p184 = pnand %p182, %p183
    %p185 = pneg %p184
    // Predicated region
    $region9: #{tpu_custom_call.1} parent=5 // pred_check
      _
    $region10: #{tpu_custom_call.1} parent=5 // pred_check_branch
      %187 = sbr.rel (%p184) target = $region12
    $region11: #{tpu_custom_call.1} parent=5 // pred_region
      %s188 = ssub.s32 %s12, 1
      // Predicated region
      $region13: #{tpu_custom_call.1} parent=11 // pred_check
        %p189 = pneg %p33
      $region14: #{tpu_custom_call.1} parent=11 // pred_check_branch
        %191 = sbr.rel (%p189) target = $region16
      $region15: #{tpu_custom_call.1} parent=11 // pred_region
        _
      $region16: #{tpu_custom_call.1} parent=11 // pred_fallthru
        _
      // Predicated region
      $region17: #{tpu_custom_call.1} parent=11 // pred_check
        %p192 = pneg %p106
      $region18: #{tpu_custom_call.1} parent=11 // pred_check_branch
        %194 = sbr.rel (%p192) target = $region20
      $region19: #{tpu_custom_call.1} parent=11 // pred_region
        _
      $region20: #{tpu_custom_call.1} parent=11 // pred_fallthru
        _
      // Predicated region
      $region21: #{tpu_custom_call.1} parent=11 // pred_check
        %p195 = pneg %p127
      $region22: #{tpu_custom_call.1} parent=11 // pred_check_branch
        %197 = sbr.rel (%p195) target = $region24
      $region23: #{tpu_custom_call.1} parent=11 // pred_region
        _
      $region24: #{tpu_custom_call.1} parent=11 // pred_fallthru
        _
      // Predicated region
      $region25: #{tpu_custom_call.1} parent=11 // pred_check
        %p198 = pneg %p148
      $region26: #{tpu_custom_call.1} parent=11 // pred_check_branch
        %200 = sbr.rel (%p198) target = $region28
      $region27: #{tpu_custom_call.1} parent=11 // pred_region
        _
      $region28: #{tpu_custom_call.1} parent=11 // pred_fallthru
        _
    $region12: #{tpu_custom_call.1} parent=5 // pred_fallthru
      _
    %p201 = scmp.lt.s32.totalorder %s12, 2
    // Predicated region
    $region29: #{tpu_custom_call.1} parent=5 // pred_check
      %p202 = pneg %p201
    $region30: #{tpu_custom_call.1} parent=5 // pred_check_branch
      %204 = sbr.rel (%p202) target = $region32
    $region31: #{tpu_custom_call.1} parent=5 // pred_region
      // Predicated region
      $region33: #{tpu_custom_call.1} parent=31 // pred_check
        %p205 = pneg %p53
      $region34: #{tpu_custom_call.1} parent=31 // pred_check_branch
        %207 = sbr.rel (%p205) target = $region36
      $region35: #{tpu_custom_call.1} parent=31 // pred_region
        %s208 = smul.u32 32, %s12
        %p209 = scmp.lt.s32.totalorder %s208, 63
        %s210 = scalar_select %p209, %s208, 63
        %s211 = smul.addr %s210, 8
        %s212 = scalar_lea.vmem %s1, %s211
        %s213 = smul.u32 32, %s12
      $region36: #{tpu_custom_call.1} parent=31 // pred_fallthru
        _
      // Predicated region
      $region37: #{tpu_custom_call.1} parent=31 // pred_check
        %p214 = pneg %p79
      $region38: #{tpu_custom_call.1} parent=31 // pred_check_branch
        %216 = sbr.rel (%p214) target = $region40
      $region39: #{tpu_custom_call.1} parent=31 // pred_region
        %s217 = smul.u32 32, %s12
        %p218 = scmp.lt.s32.totalorder %s217, 63
        %s219 = scalar_select %p218, %s217, 63
        %s220 = smul.addr %s219, 8
        %s221 = scalar_lea.vmem %s2, %s220
        %s222 = smul.u32 32, %s12
      $region40: #{tpu_custom_call.1} parent=31 // pred_fallthru
        _
    $region32: #{tpu_custom_call.1} parent=5 // pred_fallthru
      _
    %p223 = scmp.le.s32.totalorder 1, %s12
    %p224 = scmp.lt.s32.totalorder %s12, 3
    %p225 = pnand %p223, %p224
    %p226 = pneg %p225
    // Predicated region
    $region41: #{tpu_custom_call.1} parent=5 // pred_check
      _
    $region42: #{tpu_custom_call.1} parent=5 // pred_check_branch
      %228 = sbr.rel (%p225) target = $region44
    $region43: #{tpu_custom_call.1} parent=5 // pred_region
      %s229 = ssub.s32 %s12, 1
      %p230 = pneg %p33
      %p231 = pneg %p30
      %s232 = smul.u32 32, %s17
      %p233 = scmp.lt.s32.totalorder %s232, 63
      %s234 = scalar_select %p233, %s232, 63
      %s235 = smul.addr %s234, 8
      %s236 = scalar_lea.vmem %s1, %s235
      %p237 = pneg %p59
      %p238 = pneg %p56
      %s239 = smul.u32 32, %s17
      %p240 = scmp.lt.s32.totalorder %s239, 63
      %s241 = scalar_select %p240, %s239, 63
      %s242 = smul.addr %s241, 8
      %s243 = scalar_lea.vmem %s2, %s242
      %p244 = pneg %p85
      %p245 = pneg %p82
      %p246 = pneg %p106
      %p247 = pneg %p103
      %p248 = pneg %p127
      %p249 = pneg %p124
      %p250 = pneg %p148
      %p251 = pneg %p145
      %p252 = pneg %p174
      %p253 = pneg %p171
      %s254 = smul.u32 32, %s17
      %p255 = scmp.lt.s32.totalorder %s254, 63
      %s256 = scalar_select %p255, %s254, 63
      %s257 = smul.addr %s256, 4
      %s258 = scalar_lea.vmem %s6, %s257
      %s259 = smul.u32 32, %s17
      %p260 = scmp.lt.s32.totalorder %s259, 63
      %s261 = scalar_select %p260, %s259, 63
      %s262 = smul.addr %s261, 8
      %s263 = scalar_lea.vmem %s1, %s262
      %s264 = smul.u32 32, %s17
      %s265 = smul.u32 32, %s17
      %p266 = scmp.lt.s32.totalorder %s265, 63
      %s267 = scalar_select %p266, %s265, 63
      %s268 = smul.addr %s267, 8
      %s269 = scalar_lea.vmem %s2, %s268
      %s270 = smul.u32 32, %s17
      %s271 = smul.u32 32, %s17
      %p272 = scmp.lt.s32.totalorder %s271, 63
      %s273 = scalar_select %p272, %s271, 63
      %s274 = smul.addr %s273, 4
      %s275 = scalar_lea.vmem %s6, %s274
      %s276 = smul.u32 32, %s17
      %v277 = vlaneseq
      %v278 = vand.u32 %v277, 127
      %v279 = vld [vmem:[%s263] sm:$0xff]
      %v280 = vld [vmem:[%s263 + $0x8] sm:$0xff]
      %v281 = vld [vmem:[%s263 + $0x10] sm:$0xff]
      %v282 = vld [vmem:[%s263 + $0x18] sm:$0xff]
      %v283 = vld [vmem:[%s263 + $0x20] sm:$0xff]
      %v284 = vld [vmem:[%s263 + $0x28] sm:$0xff]
      %v285 = vld [vmem:[%s263 + $0x30] sm:$0xff]
      %v286 = vld [vmem:[%s263 + $0x38] sm:$0xff]
      %v287 = vld [vmem:[%s263 + $0x40] sm:$0xff]
      %v288 = vld [vmem:[%s263 + $0x48] sm:$0xff]
      %v289 = vld [vmem:[%s263 + $0x50] sm:$0xff]
      %v290 = vld [vmem:[%s263 + $0x58] sm:$0xff]
      %v291 = vld [vmem:[%s263 + $0x60] sm:$0xff]
      %v292 = vld [vmem:[%s263 + $0x68] sm:$0xff]
      %v293 = vld [vmem:[%s263 + $0x70] sm:$0xff]
      %v294 = vld [vmem:[%s263 + $0x78] sm:$0xff]
      %v295 = vld [vmem:[%s263 + $0x80] sm:$0xff]
      %v296 = vld [vmem:[%s263 + $0x88] sm:$0xff]
      %v297 = vld [vmem:[%s263 + $0x90] sm:$0xff]
      %v298 = vld [vmem:[%s263 + $0x98] sm:$0xff]
      %v299 = vld [vmem:[%s263 + $0xa0] sm:$0xff]
      %v300 = vld [vmem:[%s263 + $0xa8] sm:$0xff]
      %v301 = vld [vmem:[%s263 + $0xb0] sm:$0xff]
      %v302 = vld [vmem:[%s263 + $0xb8] sm:$0xff]
      %v303 = vld [vmem:[%s263 + $0xc0] sm:$0xff]
      %v304 = vld [vmem:[%s263 + $0xc8] sm:$0xff]
      %v305 = vld [vmem:[%s263 + $0xd0] sm:$0xff]
      %v306 = vld [vmem:[%s263 + $0xd8] sm:$0xff]
      %v307 = vld [vmem:[%s263 + $0xe0] sm:$0xff]
      %v308 = vld [vmem:[%s263 + $0xe8] sm:$0xff]
      %v309 = vld [vmem:[%s263 + $0xf0] sm:$0xff]
      %v310 = vld [vmem:[%s263 + $0xf8] sm:$0xff]
      %311 = vset.pattern.permute.xlu0 0
      %312 = vperm.xlu0 %311, %v279
      %v313 = vpop.permute.xlu0 %312
      %314 = vset.pattern.permute.xlu0 0
      %315 = vperm.xlu0 %314, %v280
      %v316 = vpop.permute.xlu0 %315
      %317 = vset.pattern.permute.xlu0 0
      %318 = vperm.xlu0 %317, %v281
      %v319 = vpop.permute.xlu0 %318
      %320 = vset.pattern.permute.xlu0 0
      %321 = vperm.xlu0 %320, %v282
      %v322 = vpop.permute.xlu0 %321
      %323 = vset.pattern.permute.xlu0 0
      %324 = vperm.xlu0 %323, %v283
      %v325 = vpop.permute.xlu0 %324
      %326 = vset.pattern.permute.xlu0 0
      %327 = vperm.xlu0 %326, %v284
      %v328 = vpop.permute.xlu0 %327
      %329 = vset.pattern.permute.xlu0 0
      %330 = vperm.xlu0 %329, %v285
      %v331 = vpop.permute.xlu0 %330
      %332 = vset.pattern.permute.xlu0 0
      %333 = vperm.xlu0 %332, %v286
      %v334 = vpop.permute.xlu0 %333
      %335 = vset.pattern.permute.xlu0 0
      %336 = vperm.xlu0 %335, %v287
      %v337 = vpop.permute.xlu0 %336
      %338 = vset.pattern.permute.xlu0 0
      %339 = vperm.xlu0 %338, %v288
      %v340 = vpop.permute.xlu0 %339
      %341 = vset.pattern.permute.xlu0 0
      %342 = vperm.xlu0 %341, %v289
      %v343 = vpop.permute.xlu0 %342
      %344 = vset.pattern.permute.xlu0 0
      %345 = vperm.xlu0 %344, %v290
      %v346 = vpop.permute.xlu0 %345
      %347 = vset.pattern.permute.xlu0 0
      %348 = vperm.xlu0 %347, %v291
      %v349 = vpop.permute.xlu0 %348
      %350 = vset.pattern.permute.xlu0 0
      %351 = vperm.xlu0 %350, %v292
      %v352 = vpop.permute.xlu0 %351
      %353 = vset.pattern.permute.xlu0 0
      %354 = vperm.xlu0 %353, %v293
      %v355 = vpop.permute.xlu0 %354
      %356 = vset.pattern.permute.xlu0 0
      %357 = vperm.xlu0 %356, %v294
      %v358 = vpop.permute.xlu0 %357
      %359 = vset.pattern.permute.xlu0 0
      %360 = vperm.xlu0 %359, %v295
      %v361 = vpop.permute.xlu0 %360
      %362 = vset.pattern.permute.xlu0 0
      %363 = vperm.xlu0 %362, %v296
      %v364 = vpop.permute.xlu0 %363
      %365 = vset.pattern.permute.xlu0 0
      %366 = vperm.xlu0 %365, %v297
      %v367 = vpop.permute.xlu0 %366
      %368 = vset.pattern.permute.xlu0 0
      %369 = vperm.xlu0 %368, %v298
      %v370 = vpop.permute.xlu0 %369
      %371 = vset.pattern.permute.xlu0 0
      %372 = vperm.xlu0 %371, %v299
      %v373 = vpop.permute.xlu0 %372
      %374 = vset.pattern.permute.xlu0 0
      %375 = vperm.xlu0 %374, %v300
      %v376 = vpop.permute.xlu0 %375
      %377 = vset.pattern.permute.xlu0 0
      %378 = vperm.xlu0 %377, %v301
      %v379 = vpop.permute.xlu0 %378
      %380 = vset.pattern.permute.xlu0 0
      %381 = vperm.xlu0 %380, %v302
      %v382 = vpop.permute.xlu0 %381
      %383 = vset.pattern.permute.xlu0 0
      %384 = vperm.xlu0 %383, %v303
      %v385 = vpop.permute.xlu0 %384
      %386 = vset.pattern.permute.xlu0 0
      %387 = vperm.xlu0 %386, %v304
      %v388 = vpop.permute.xlu0 %387
      %389 = vset.pattern.permute.xlu0 0
      %390 = vperm.xlu0 %389, %v305
      %v391 = vpop.permute.xlu0 %390
      %392 = vset.pattern.permute.xlu0 0
      %393 = vperm.xlu0 %392, %v306
      %v394 = vpop.permute.xlu0 %393
      %395 = vset.pattern.permute.xlu0 0
      %396 = vperm.xlu0 %395, %v307
      %v397 = vpop.permute.xlu0 %396
      %398 = vset.pattern.permute.xlu0 0
      %399 = vperm.xlu0 %398, %v308
      %v400 = vpop.permute.xlu0 %399
      %401 = vset.pattern.permute.xlu0 0
      %402 = vperm.xlu0 %401, %v309
      %v403 = vpop.permute.xlu0 %402
      %404 = vset.pattern.permute.xlu0 0
      %405 = vperm.xlu0 %404, %v310
      %v406 = vpop.permute.xlu0 %405
      %vm407 = vcmp.eq.s32.totalorder %v278, %v313
      %vm408 = vcmp.eq.s32.totalorder %v278, %v316
      %vm409 = vcmp.eq.s32.totalorder %v278, %v319
      %vm410 = vcmp.eq.s32.totalorder %v278, %v322
      %vm411 = vcmp.eq.s32.totalorder %v278, %v325
      %vm412 = vcmp.eq.s32.totalorder %v278, %v328
      %vm413 = vcmp.eq.s32.totalorder %v278, %v331
      %vm414 = vcmp.eq.s32.totalorder %v278, %v334
      %vm415 = vcmp.eq.s32.totalorder %v278, %v337
      %vm416 = vcmp.eq.s32.totalorder %v278, %v340
      %vm417 = vcmp.eq.s32.totalorder %v278, %v343
      %vm418 = vcmp.eq.s32.totalorder %v278, %v346
      %vm419 = vcmp.eq.s32.totalorder %v278, %v349
      %vm420 = vcmp.eq.s32.totalorder %v278, %v352
      %vm421 = vcmp.eq.s32.totalorder %v278, %v355
      %vm422 = vcmp.eq.s32.totalorder %v278, %v358
      %vm423 = vcmp.eq.s32.totalorder %v278, %v361
      %vm424 = vcmp.eq.s32.totalorder %v278, %v364
      %vm425 = vcmp.eq.s32.totalorder %v278, %v367
      %vm426 = vcmp.eq.s32.totalorder %v278, %v370
      %vm427 = vcmp.eq.s32.totalorder %v278, %v373
      %vm428 = vcmp.eq.s32.totalorder %v278, %v376
      %vm429 = vcmp.eq.s32.totalorder %v278, %v379
      %vm430 = vcmp.eq.s32.totalorder %v278, %v382
      %vm431 = vcmp.eq.s32.totalorder %v278, %v385
      %vm432 = vcmp.eq.s32.totalorder %v278, %v388
      %vm433 = vcmp.eq.s32.totalorder %v278, %v391
      %vm434 = vcmp.eq.s32.totalorder %v278, %v394
      %vm435 = vcmp.eq.s32.totalorder %v278, %v397
      %vm436 = vcmp.eq.s32.totalorder %v278, %v400
      %vm437 = vcmp.eq.s32.totalorder %v278, %v403
      %vm438 = vcmp.eq.s32.totalorder %v278, %v406
      %v439 = vld [vmem:[%s269] sm:$0xff]
      %v440 = vld [vmem:[%s269 + $0x8] sm:$0xff]
      %v441 = vld [vmem:[%s269 + $0x10] sm:$0xff]
      %v442 = vld [vmem:[%s269 + $0x18] sm:$0xff]
      %v443 = vld [vmem:[%s269 + $0x20] sm:$0xff]
      %v444 = vld [vmem:[%s269 + $0x28] sm:$0xff]
      %v445 = vld [vmem:[%s269 + $0x30] sm:$0xff]
      %v446 = vld [vmem:[%s269 + $0x38] sm:$0xff]
      %v447 = vld [vmem:[%s269 + $0x40] sm:$0xff]
      %v448 = vld [vmem:[%s269 + $0x48] sm:$0xff]
      %v449 = vld [vmem:[%s269 + $0x50] sm:$0xff]
      %v450 = vld [vmem:[%s269 + $0x58] sm:$0xff]
      %v451 = vld [vmem:[%s269 + $0x60] sm:$0xff]
      %v452 = vld [vmem:[%s269 + $0x68] sm:$0xff]
      %v453 = vld [vmem:[%s269 + $0x70] sm:$0xff]
      %v454 = vld [vmem:[%s269 + $0x78] sm:$0xff]
      %v455 = vld [vmem:[%s269 + $0x80] sm:$0xff]
      %v456 = vld [vmem:[%s269 + $0x88] sm:$0xff]
      %v457 = vld [vmem:[%s269 + $0x90] sm:$0xff]
      %v458 = vld [vmem:[%s269 + $0x98] sm:$0xff]
      %v459 = vld [vmem:[%s269 + $0xa0] sm:$0xff]
      %v460 = vld [vmem:[%s269 + $0xa8] sm:$0xff]
      %v461 = vld [vmem:[%s269 + $0xb0] sm:$0xff]
      %v462 = vld [vmem:[%s269 + $0xb8] sm:$0xff]
      %v463 = vld [vmem:[%s269 + $0xc0] sm:$0xff]
      %v464 = vld [vmem:[%s269 + $0xc8] sm:$0xff]
      %v465 = vld [vmem:[%s269 + $0xd0] sm:$0xff]
      %v466 = vld [vmem:[%s269 + $0xd8] sm:$0xff]
      %v467 = vld [vmem:[%s269 + $0xe0] sm:$0xff]
      %v468 = vld [vmem:[%s269 + $0xe8] sm:$0xff]
      %v469 = vld [vmem:[%s269 + $0xf0] sm:$0xff]
      %v470 = vld [vmem:[%s269 + $0xf8] sm:$0xff]
      %v471 = vadd.s32 %v439, 64
      %v472 = vadd.s32 %v440, 64
      %v473 = vadd.s32 %v441, 64
      %v474 = vadd.s32 %v442, 64
      %v475 = vadd.s32 %v443, 64
      %v476 = vadd.s32 %v444, 64
      %v477 = vadd.s32 %v445, 64
      %v478 = vadd.s32 %v446, 64
      %v479 = vadd.s32 %v447, 64
      %v480 = vadd.s32 %v448, 64
      %v481 = vadd.s32 %v449, 64
      %v482 = vadd.s32 %v450, 64
      %v483 = vadd.s32 %v451, 64
      %v484 = vadd.s32 %v452, 64
      %v485 = vadd.s32 %v453, 64
      %v486 = vadd.s32 %v454, 64
      %v487 = vadd.s32 %v455, 64
      %v488 = vadd.s32 %v456, 64
      %v489 = vadd.s32 %v457, 64
      %v490 = vadd.s32 %v458, 64
      %v491 = vadd.s32 %v459, 64
      %v492 = vadd.s32 %v460, 64
      %v493 = vadd.s32 %v461, 64
      %v494 = vadd.s32 %v462, 64
      %v495 = vadd.s32 %v463, 64
      %v496 = vadd.s32 %v464, 64
      %v497 = vadd.s32 %v465, 64
      %v498 = vadd.s32 %v466, 64
      %v499 = vadd.s32 %v467, 64
      %v500 = vadd.s32 %v468, 64
      %v501 = vadd.s32 %v469, 64
      %v502 = vadd.s32 %v470, 64
      %503 = vset.pattern.permute.xlu0 0
      %504 = vperm.xlu0 %503, %v471
      %v505 = vpop.permute.xlu0 %504
      %506 = vset.pattern.permute.xlu0 0
      %507 = vperm.xlu0 %506, %v472
      %v508 = vpop.permute.xlu0 %507
      %509 = vset.pattern.permute.xlu0 0
      %510 = vperm.xlu0 %509, %v473
      %v511 = vpop.permute.xlu0 %510
      %512 = vset.pattern.permute.xlu0 0
      %513 = vperm.xlu0 %512, %v474
      %v514 = vpop.permute.xlu0 %513
      %515 = vset.pattern.permute.xlu0 0
      %516 = vperm.xlu0 %515, %v475
      %v517 = vpop.permute.xlu0 %516
      %518 = vset.pattern.permute.xlu0 0
      %519 = vperm.xlu0 %518, %v476
      %v520 = vpop.permute.xlu0 %519
      %521 = vset.pattern.permute.xlu0 0
      %522 = vperm.xlu0 %521, %v477
      %v523 = vpop.permute.xlu0 %522
      %524 = vset.pattern.permute.xlu0 0
      %525 = vperm.xlu0 %524, %v478
      %v526 = vpop.permute.xlu0 %525
      %527 = vset.pattern.permute.xlu0 0
      %528 = vperm.xlu0 %527, %v479
      %v529 = vpop.permute.xlu0 %528
      %530 = vset.pattern.permute.xlu0 0
      %531 = vperm.xlu0 %530, %v480
      %v532 = vpop.permute.xlu0 %531
      %533 = vset.pattern.permute.xlu0 0
      %534 = vperm.xlu0 %533, %v481
      %v535 = vpop.permute.xlu0 %534
      %536 = vset.pattern.permute.xlu0 0
      %537 = vperm.xlu0 %536, %v482
      %v538 = vpop.permute.xlu0 %537
      %539 = vset.pattern.permute.xlu0 0
      %540 = vperm.xlu0 %539, %v483
      %v541 = vpop.permute.xlu0 %540
      %542 = vset.pattern.permute.xlu0 0
      %543 = vperm.xlu0 %542, %v484
      %v544 = vpop.permute.xlu0 %543
      %545 = vset.pattern.permute.xlu0 0
      %546 = vperm.xlu0 %545, %v485
      %v547 = vpop.permute.xlu0 %546
      %548 = vset.pattern.permute.xlu0 0
      %549 = vperm.xlu0 %548, %v486
      %v550 = vpop.permute.xlu0 %549
      %551 = vset.pattern.permute.xlu0 0
      %552 = vperm.xlu0 %551, %v487
      %v553 = vpop.permute.xlu0 %552
      %554 = vset.pattern.permute.xlu0 0
      %555 = vperm.xlu0 %554, %v488
      %v556 = vpop.permute.xlu0 %555
      %557 = vset.pattern.permute.xlu0 0
      %558 = vperm.xlu0 %557, %v489
      %v559 = vpop.permute.xlu0 %558
      %560 = vset.pattern.permute.xlu0 0
      %561 = vperm.xlu0 %560, %v490
      %v562 = vpop.permute.xlu0 %561
      %563 = vset.pattern.permute.xlu0 0
      %564 = vperm.xlu0 %563, %v491
      %v565 = vpop.permute.xlu0 %564
      %566 = vset.pattern.permute.xlu0 0
      %567 = vperm.xlu0 %566, %v492
      %v568 = vpop.permute.xlu0 %567
      %569 = vset.pattern.permute.xlu0 0
      %570 = vperm.xlu0 %569, %v493
      %v571 = vpop.permute.xlu0 %570
      %572 = vset.pattern.permute.xlu0 0
      %573 = vperm.xlu0 %572, %v494
      %v574 = vpop.permute.xlu0 %573
      %575 = vset.pattern.permute.xlu0 0
      %576 = vperm.xlu0 %575, %v495
      %v577 = vpop.permute.xlu0 %576
      %578 = vset.pattern.permute.xlu0 0
      %579 = vperm.xlu0 %578, %v496
      %v580 = vpop.permute.xlu0 %579
      %581 = vset.pattern.permute.xlu0 0
      %582 = vperm.xlu0 %581, %v497
      %v583 = vpop.permute.xlu0 %582
      %584 = vset.pattern.permute.xlu0 0
      %585 = vperm.xlu0 %584, %v498
      %v586 = vpop.permute.xlu0 %585
      %587 = vset.pattern.permute.xlu0 0
      %588 = vperm.xlu0 %587, %v499
      %v589 = vpop.permute.xlu0 %588
      %590 = vset.pattern.permute.xlu0 0
      %591 = vperm.xlu0 %590, %v500
      %v592 = vpop.permute.xlu0 %591
      %593 = vset.pattern.permute.xlu0 0
      %594 = vperm.xlu0 %593, %v501
      %v595 = vpop.permute.xlu0 %594
      %596 = vset.pattern.permute.xlu0 0
      %597 = vperm.xlu0 %596, %v502
      %v598 = vpop.permute.xlu0 %597
      %vm599 = vcmp.eq.s32.totalorder %v278, %v505
      %vm600 = vcmp.eq.s32.totalorder %v278, %v508
      %vm601 = vcmp.eq.s32.totalorder %v278, %v511
      %vm602 = vcmp.eq.s32.totalorder %v278, %v514
      %vm603 = vcmp.eq.s32.totalorder %v278, %v517
      %vm604 = vcmp.eq.s32.totalorder %v278, %v520
      %vm605 = vcmp.eq.s32.totalorder %v278, %v523
      %vm606 = vcmp.eq.s32.totalorder %v278, %v526
      %vm607 = vcmp.eq.s32.totalorder %v278, %v529
      %vm608 = vcmp.eq.s32.totalorder %v278, %v532
      %vm609 = vcmp.eq.s32.totalorder %v278, %v535
      %vm610 = vcmp.eq.s32.totalorder %v278, %v538
      %vm611 = vcmp.eq.s32.totalorder %v278, %v541
      %vm612 = vcmp.eq.s32.totalorder %v278, %v544
      %vm613 = vcmp.eq.s32.totalorder %v278, %v547
      %vm614 = vcmp.eq.s32.totalorder %v278, %v550
      %vm615 = vcmp.eq.s32.totalorder %v278, %v553
      %vm616 = vcmp.eq.s32.totalorder %v278, %v556
      %vm617 = vcmp.eq.s32.totalorder %v278, %v559
      %vm618 = vcmp.eq.s32.totalorder %v278, %v562
      %vm619 = vcmp.eq.s32.totalorder %v278, %v565
      %vm620 = vcmp.eq.s32.totalorder %v278, %v568
      %vm621 = vcmp.eq.s32.totalorder %v278, %v571
      %vm622 = vcmp.eq.s32.totalorder %v278, %v574
      %vm623 = vcmp.eq.s32.totalorder %v278, %v577
      %vm624 = vcmp.eq.s32.totalorder %v278, %v580
      %vm625 = vcmp.eq.s32.totalorder %v278, %v583
      %vm626 = vcmp.eq.s32.totalorder %v278, %v586
      %vm627 = vcmp.eq.s32.totalorder %v278, %v589
      %vm628 = vcmp.eq.s32.totalorder %v278, %v592
      %vm629 = vcmp.eq.s32.totalorder %v278, %v595
      %vm630 = vcmp.eq.s32.totalorder %v278, %v598
      %vm631 = vmor %vm407, %vm599
      %vm632 = vmor %vm408, %vm600
      %vm633 = vmor %vm409, %vm601
      %vm634 = vmor %vm410, %vm602
      %vm635 = vmor %vm411, %vm603
      %vm636 = vmor %vm412, %vm604
      %vm637 = vmor %vm413, %vm605
      %vm638 = vmor %vm414, %vm606
      %vm639 = vmor %vm415, %vm607
      %vm640 = vmor %vm416, %vm608
      %vm641 = vmor %vm417, %vm609
      %vm642 = vmor %vm418, %vm610
      %vm643 = vmor %vm419, %vm611
      %vm644 = vmor %vm420, %vm612
      %vm645 = vmor %vm421, %vm613
      %vm646 = vmor %vm422, %vm614
      %vm647 = vmor %vm423, %vm615
      %vm648 = vmor %vm424, %vm616
      %vm649 = vmor %vm425, %vm617
      %vm650 = vmor %vm426, %vm618
      %vm651 = vmor %vm427, %vm619
      %vm652 = vmor %vm428, %vm620
      %vm653 = vmor %vm429, %vm621
      %vm654 = vmor %vm430, %vm622
      %vm655 = vmor %vm431, %vm623
      %vm656 = vmor %vm432, %vm624
      %vm657 = vmor %vm433, %vm625
      %vm658 = vmor %vm434, %vm626
      %vm659 = vmor %vm435, %vm627
      %vm660 = vmor %vm436, %vm628
      %vm661 = vmor %vm437, %vm629
      %vm662 = vmor %vm438, %vm630
      %v663 = vsel %vm631, 1, 0
      %v664 = vsel %vm632, 1, 0
      %v665 = vsel %vm633, 1, 0
      %v666 = vsel %vm634, 1, 0
      %v667 = vsel %vm635, 1, 0
      %v668 = vsel %vm636, 1, 0
      %v669 = vsel %vm637, 1, 0
      %v670 = vsel %vm638, 1, 0
      %v671 = vsel %vm639, 1, 0
      %v672 = vsel %vm640, 1, 0
      %v673 = vsel %vm641, 1, 0
      %v674 = vsel %vm642, 1, 0
      %v675 = vsel %vm643, 1, 0
      %v676 = vsel %vm644, 1, 0
      %v677 = vsel %vm645, 1, 0
      %v678 = vsel %vm646, 1, 0
      %v679 = vsel %vm647, 1, 0
      %v680 = vsel %vm648, 1, 0
      %v681 = vsel %vm649, 1, 0
      %v682 = vsel %vm650, 1, 0
      %v683 = vsel %vm651, 1, 0
      %v684 = vsel %vm652, 1, 0
      %v685 = vsel %vm653, 1, 0
      %v686 = vsel %vm654, 1, 0
      %v687 = vsel %vm655, 1, 0
      %v688 = vsel %vm656, 1, 0
      %v689 = vsel %vm657, 1, 0
      %v690 = vsel %vm658, 1, 0
      %v691 = vsel %vm659, 1, 0
      %v692 = vsel %vm660, 1, 0
      %v693 = vsel %vm661, 1, 0
      %v694 = vsel %vm662, 1, 0
      %v695 = vcvt.s32.f32 %v663
      %v696 = vcvt.s32.f32 %v664
      %v697 = vcvt.s32.f32 %v665
      %v698 = vcvt.s32.f32 %v666
      %v699 = vcvt.s32.f32 %v667
      %v700 = vcvt.s32.f32 %v668
      %v701 = vcvt.s32.f32 %v669
      %v702 = vcvt.s32.f32 %v670
      %v703 = vcvt.s32.f32 %v671
      %v704 = vcvt.s32.f32 %v672
      %v705 = vcvt.s32.f32 %v673
      %v706 = vcvt.s32.f32 %v674
      %v707 = vcvt.s32.f32 %v675
      %v708 = vcvt.s32.f32 %v676
      %v709 = vcvt.s32.f32 %v677
      %v710 = vcvt.s32.f32 %v678
      %v711 = vcvt.s32.f32 %v679
      %v712 = vcvt.s32.f32 %v680
      %v713 = vcvt.s32.f32 %v681
      %v714 = vcvt.s32.f32 %v682
      %v715 = vcvt.s32.f32 %v683
      %v716 = vcvt.s32.f32 %v684
      %v717 = vcvt.s32.f32 %v685
      %v718 = vcvt.s32.f32 %v686
      %v719 = vcvt.s32.f32 %v687
      %v720 = vcvt.s32.f32 %v688
      %v721 = vcvt.s32.f32 %v689
      %v722 = vcvt.s32.f32 %v690
      %v723 = vcvt.s32.f32 %v691
      %v724 = vcvt.s32.f32 %v692
      %v725 = vcvt.s32.f32 %v693
      %v726 = vcvt.s32.f32 %v694
      %v727 = vld [vmem:[%s0] sm:$0xff]
      %v728 = vld [vmem:[%s0 + $0x8] sm:$0xff]
      %v729 = vld [vmem:[%s0 + $0x10] sm:$0xff]
      %v730 = vld [vmem:[%s0 + $0x18] sm:$0xff]
      %v731 = vld [vmem:[%s0 + $0x20] sm:$0xff]
      %v732 = vld [vmem:[%s0 + $0x28] sm:$0xff]
      %v733 = vld [vmem:[%s0 + $0x30] sm:$0xff]
      %v734 = vld [vmem:[%s0 + $0x38] sm:$0xff]
      %v735 = vld [vmem:[%s0 + $0x40] sm:$0xff]
      %v736 = vld [vmem:[%s0 + $0x48] sm:$0xff]
      %v737 = vld [vmem:[%s0 + $0x50] sm:$0xff]
      %v738 = vld [vmem:[%s0 + $0x58] sm:$0xff]
      %v739 = vld [vmem:[%s0 + $0x60] sm:$0xff]
      %v740 = vld [vmem:[%s0 + $0x68] sm:$0xff]
      %v741 = vld [vmem:[%s0 + $0x70] sm:$0xff]
      %v742 = vld [vmem:[%s0 + $0x78] sm:$0xff]
      %743 = vmatprep.subr.mxu0 0.0
      %744 = vmatpush1.msra.mxu0 %v742
      %745 = vmatprep.subr.mxu0 0.0
      %746 = vmatpush1.msra.mxu0 %v741
      %747 = vmatprep.subr.mxu0 0.0
      %748 = vmatpush1.msra.mxu0 %v740
      %749 = vmatprep.subr.mxu0 0.0
      %750 = vmatpush1.msra.mxu0 %v739
      %751 = vmatprep.subr.mxu0 0.0
      %752 = vmatpush1.msra.mxu0 %v738
      %753 = vmatprep.subr.mxu0 0.0
      %754 = vmatpush1.msra.mxu0 %v737
      %755 = vmatprep.subr.mxu0 0.0
      %756 = vmatpush1.msra.mxu0 %v736
      %757 = vmatprep.subr.mxu0 0.0
      %758 = vmatpush1.msra.mxu0 %v735
      %759 = vmatprep.subr.mxu0 0.0
      %760 = vmatpush1.msra.mxu0 %v734
      %761 = vmatprep.subr.mxu0 0.0
      %762 = vmatpush1.msra.mxu0 %v733
      %763 = vmatprep.subr.mxu0 0.0
      %764 = vmatpush1.msra.mxu0 %v732
      %765 = vmatprep.subr.mxu0 0.0
      %766 = vmatpush1.msra.mxu0 %v731
      %767 = vmatprep.subr.mxu0 0.0
      %768 = vmatpush1.msra.mxu0 %v730
      %769 = vmatprep.subr.mxu0 0.0
      %770 = vmatpush1.msra.mxu0 %v729
      %771 = vmatprep.subr.mxu0 0.0
      %772 = vmatpush1.msra.mxu0 %v728
      %773 = vmatprep.subr.mxu0 0.0
      %774 = vmatpush1.msra.mxu0 %v727
      %775 = vmatprep.subr.mxu0 0.0
      %776 = vmatpush2.msra.mxu0 0.0
      %777 = vmatprep.subr.mxu0 0.0
      %778 = vmatpush2.msra.mxu0 0.0
      %779 = vmatprep.subr.mxu0 0.0
      %780 = vmatpush2.msra.mxu0 0.0
      %781 = vmatprep.subr.mxu0 0.0
      %782 = vmatpush2.msra.mxu0 0.0
      %783 = vmatprep.subr.mxu0 0.0
      %784 = vmatpush2.msra.mxu0 0.0
      %785 = vmatprep.subr.mxu0 0.0
      %786 = vmatpush2.msra.mxu0 0.0
      %787 = vmatprep.subr.mxu0 0.0
      %788 = vmatpush2.msra.mxu0 0.0
      %789 = vmatprep.subr.mxu0 0.0
      %790 = vmatpush2.msra.mxu0 0.0
      %791 = vmatprep.subr.mxu0 0.0
      %792 = vmatpush2.msra.mxu0 0.0
      %793 = vmatprep.subr.mxu0 0.0
      %794 = vmatpush2.msra.mxu0 0.0
      %795 = vmatprep.subr.mxu0 0.0
      %796 = vmatpush2.msra.mxu0 0.0
      %797 = vmatprep.subr.mxu0 0.0
      %798 = vmatpush2.msra.mxu0 0.0
      %799 = vmatprep.subr.mxu0 0.0
      %800 = vmatpush2.msra.mxu0 0.0
      %801 = vmatprep.subr.mxu0 0.0
      %802 = vmatpush2.msra.mxu0 0.0
      %803 = vmatprep.subr.mxu0 0.0
      %804 = vmatpush2.msra.mxu0 0.0
      %805 = vmatprep.subr.mxu0 0.0
      %806 = vmatpush2.msra.mxu0 0.0
      %807 = vmatprep.mubr.f32.mxu0 0.0
      %808 = vmatmul.mubr.f32.gmra.mxu0 %v695
      %v809 = vpop.f32.mrf.mxu0
      %v810 = vadd.f32 0.0, %v809
      %v811 = vpop.f32.mrf.mxu0
      %812 = vmatprep.mubr.f32.mxu0 0.0
      %813 = vmatmul.mubr.f32.gmra.mxu0 %v696
      %v814 = vpop.f32.mrf.mxu0
      %v815 = vadd.f32 0.0, %v814
      %v816 = vpop.f32.mrf.mxu0
      %817 = vmatprep.mubr.f32.mxu0 0.0
      %818 = vmatmul.mubr.f32.gmra.mxu0 %v697
      %v819 = vpop.f32.mrf.mxu0
      %v820 = vadd.f32 0.0, %v819
      %v821 = vpop.f32.mrf.mxu0
      %822 = vmatprep.mubr.f32.mxu0 0.0
      %823 = vmatmul.mubr.f32.gmra.mxu0 %v698
      %v824 = vpop.f32.mrf.mxu0
      %v825 = vadd.f32 0.0, %v824
      %v826 = vpop.f32.mrf.mxu0
      %827 = vmatprep.mubr.f32.mxu0 0.0
      %828 = vmatmul.mubr.f32.gmra.mxu0 %v699
      %v829 = vpop.f32.mrf.mxu0
      %v830 = vadd.f32 0.0, %v829
      %v831 = vpop.f32.mrf.mxu0
      %832 = vmatprep.mubr.f32.mxu0 0.0
      %833 = vmatmul.mubr.f32.gmra.mxu0 %v700
      %v834 = vpop.f32.mrf.mxu0
      %v835 = vadd.f32 0.0, %v834
      %v836 = vpop.f32.mrf.mxu0
      %837 = vmatprep.mubr.f32.mxu0 0.0
      %838 = vmatmul.mubr.f32.gmra.mxu0 %v701
      %v839 = vpop.f32.mrf.mxu0
      %v840 = vadd.f32 0.0, %v839
      %v841 = vpop.f32.mrf.mxu0
      %842 = vmatprep.mubr.f32.mxu0 0.0
      %843 = vmatmul.mubr.f32.gmra.mxu0 %v702
      %v844 = vpop.f32.mrf.mxu0
      %v845 = vadd.f32 0.0, %v844
      %v846 = vpop.f32.mrf.mxu0
      %847 = vmatprep.mubr.f32.mxu0 0.0
      %848 = vmatmul.mubr.f32.gmra.mxu0 %v703
      %v849 = vpop.f32.mrf.mxu0
      %v850 = vadd.f32 0.0, %v849
      %v851 = vpop.f32.mrf.mxu0
      %852 = vmatprep.mubr.f32.mxu0 0.0
      %853 = vmatmul.mubr.f32.gmra.mxu0 %v704
      %v854 = vpop.f32.mrf.mxu0
      %v855 = vadd.f32 0.0, %v854
      %v856 = vpop.f32.mrf.mxu0
      %857 = vmatprep.mubr.f32.mxu0 0.0
      %858 = vmatmul.mubr.f32.gmra.mxu0 %v705
      %v859 = vpop.f32.mrf.mxu0
      %v860 = vadd.f32 0.0, %v859
      %v861 = vpop.f32.mrf.mxu0
      %862 = vmatprep.mubr.f32.mxu0 0.0
      %863 = vmatmul.mubr.f32.gmra.mxu0 %v706
      %v864 = vpop.f32.mrf.mxu0
      %v865 = vadd.f32 0.0, %v864
      %v866 = vpop.f32.mrf.mxu0
      %867 = vmatprep.mubr.f32.mxu0 0.0
      %868 = vmatmul.mubr.f32.gmra.mxu0 %v707
      %v869 = vpop.f32.mrf.mxu0
      %v870 = vadd.f32 0.0, %v869
      %v871 = vpop.f32.mrf.mxu0
      %872 = vmatprep.mubr.f32.mxu0 0.0
      %873 = vmatmul.mubr.f32.gmra.mxu0 %v708
      %v874 = vpop.f32.mrf.mxu0
      %v875 = vadd.f32 0.0, %v874
      %v876 = vpop.f32.mrf.mxu0
      %877 = vmatprep.mubr.f32.mxu0 0.0
      %878 = vmatmul.mubr.f32.gmra.mxu0 %v709
      %v879 = vpop.f32.mrf.mxu0
      %v880 = vadd.f32 0.0, %v879
      %v881 = vpop.f32.mrf.mxu0
      %882 = vmatprep.mubr.f32.mxu0 0.0
      %883 = vmatmul.mubr.f32.gmra.mxu0 %v710
      %v884 = vpop.f32.mrf.mxu0
      %v885 = vadd.f32 0.0, %v884
      %v886 = vpop.f32.mrf.mxu0
      %887 = vmatprep.mubr.f32.mxu0 0.0
      %888 = vmatmul.mubr.f32.gmra.mxu0 %v711
      %v889 = vpop.f32.mrf.mxu0
      %v890 = vadd.f32 0.0, %v889
      %v891 = vpop.f32.mrf.mxu0
      %892 = vmatprep.mubr.f32.mxu0 0.0
      %893 = vmatmul.mubr.f32.gmra.mxu0 %v712
      %v894 = vpop.f32.mrf.mxu0
      %v895 = vadd.f32 0.0, %v894
      %v896 = vpop.f32.mrf.mxu0
      %897 = vmatprep.mubr.f32.mxu0 0.0
      %898 = vmatmul.mubr.f32.gmra.mxu0 %v713
      %v899 = vpop.f32.mrf.mxu0
      %v900 = vadd.f32 0.0, %v899
      %v901 = vpop.f32.mrf.mxu0
      %902 = vmatprep.mubr.f32.mxu0 0.0
      %903 = vmatmul.mubr.f32.gmra.mxu0 %v714
      %v904 = vpop.f32.mrf.mxu0
      %v905 = vadd.f32 0.0, %v904
      %v906 = vpop.f32.mrf.mxu0
      %907 = vmatprep.mubr.f32.mxu0 0.0
      %908 = vmatmul.mubr.f32.gmra.mxu0 %v715
      %v909 = vpop.f32.mrf.mxu0
      %v910 = vadd.f32 0.0, %v909
      %v911 = vpop.f32.mrf.mxu0
      %912 = vmatprep.mubr.f32.mxu0 0.0
      %913 = vmatmul.mubr.f32.gmra.mxu0 %v716
      %v914 = vpop.f32.mrf.mxu0
      %v915 = vadd.f32 0.0, %v914
      %v916 = vpop.f32.mrf.mxu0
      %917 = vmatprep.mubr.f32.mxu0 0.0
      %918 = vmatmul.mubr.f32.gmra.mxu0 %v717
      %v919 = vpop.f32.mrf.mxu0
      %v920 = vadd.f32 0.0, %v919
      %v921 = vpop.f32.mrf.mxu0
      %922 = vmatprep.mubr.f32.mxu0 0.0
      %923 = vmatmul.mubr.f32.gmra.mxu0 %v718
      %v924 = vpop.f32.mrf.mxu0
      %v925 = vadd.f32 0.0, %v924
      %v926 = vpop.f32.mrf.mxu0
      %927 = vmatprep.mubr.f32.mxu0 0.0
      %928 = vmatmul.mubr.f32.gmra.mxu0 %v719
      %v929 = vpop.f32.mrf.mxu0
      %v930 = vadd.f32 0.0, %v929
      %v931 = vpop.f32.mrf.mxu0
      %932 = vmatprep.mubr.f32.mxu0 0.0
      %933 = vmatmul.mubr.f32.gmra.mxu0 %v720
      %v934 = vpop.f32.mrf.mxu0
      %v935 = vadd.f32 0.0, %v934
      %v936 = vpop.f32.mrf.mxu0
      %937 = vmatprep.mubr.f32.mxu0 0.0
      %938 = vmatmul.mubr.f32.gmra.mxu0 %v721
      %v939 = vpop.f32.mrf.mxu0
      %v940 = vadd.f32 0.0, %v939
      %v941 = vpop.f32.mrf.mxu0
      %942 = vmatprep.mubr.f32.mxu0 0.0
      %943 = vmatmul.mubr.f32.gmra.mxu0 %v722
      %v944 = vpop.f32.mrf.mxu0
      %v945 = vadd.f32 0.0, %v944
      %v946 = vpop.f32.mrf.mxu0
      %947 = vmatprep.mubr.f32.mxu0 0.0
      %948 = vmatmul.mubr.f32.gmra.mxu0 %v723
      %v949 = vpop.f32.mrf.mxu0
      %v950 = vadd.f32 0.0, %v949
      %v951 = vpop.f32.mrf.mxu0
      %952 = vmatprep.mubr.f32.mxu0 0.0
      %953 = vmatmul.mubr.f32.gmra.mxu0 %v724
      %v954 = vpop.f32.mrf.mxu0
      %v955 = vadd.f32 0.0, %v954
      %v956 = vpop.f32.mrf.mxu0
      %957 = vmatprep.mubr.f32.mxu0 0.0
      %958 = vmatmul.mubr.f32.gmra.mxu0 %v725
      %v959 = vpop.f32.mrf.mxu0
      %v960 = vadd.f32 0.0, %v959
      %v961 = vpop.f32.mrf.mxu0
      %962 = vmatprep.mubr.f32.mxu0 0.0
      %963 = vmatmul.mubr.f32.gmra.mxu0 %v726
      %v964 = vpop.f32.mrf.mxu0
      %v965 = vadd.f32 0.0, %v964
      %v966 = vpop.f32.mrf.mxu0
      %967 = vdwg.mxu0
      %v968 = vmul.f32 %v810, %v810
      %v969 = vmul.f32 %v815, %v815
      %v970 = vmul.f32 %v820, %v820
      %v971 = vmul.f32 %v825, %v825
      %v972 = vmul.f32 %v830, %v830
      %v973 = vmul.f32 %v835, %v835
      %v974 = vmul.f32 %v840, %v840
      %v975 = vmul.f32 %v845, %v845
      %v976 = vmul.f32 %v850, %v850
      %v977 = vmul.f32 %v855, %v855
      %v978 = vmul.f32 %v860, %v860
      %v979 = vmul.f32 %v865, %v865
      %v980 = vmul.f32 %v870, %v870
      %v981 = vmul.f32 %v875, %v875
      %v982 = vmul.f32 %v880, %v880
      %v983 = vmul.f32 %v885, %v885
      %v984 = vmul.f32 %v890, %v890
      %v985 = vmul.f32 %v895, %v895
      %v986 = vmul.f32 %v900, %v900
      %v987 = vmul.f32 %v905, %v905
      %v988 = vmul.f32 %v910, %v910
      %v989 = vmul.f32 %v915, %v915
      %v990 = vmul.f32 %v920, %v920
      %v991 = vmul.f32 %v925, %v925
      %v992 = vmul.f32 %v930, %v930
      %v993 = vmul.f32 %v935, %v935
      %v994 = vmul.f32 %v940, %v940
      %v995 = vmul.f32 %v945, %v945
      %v996 = vmul.f32 %v950, %v950
      %v997 = vmul.f32 %v955, %v955
      %v998 = vmul.f32 %v960, %v960
      %v999 = vmul.f32 %v965, %v965
      %vm1000 = vcmask 23552
      %v1001 = vsel %vm1000, %v968, 0.0
      %1002 = vadd.xlane.f32.xlu0 %v1001
      %v1003 = vpop.xlane.xlu0 %1002
      %v1004 = vsel %vm1000, %v969, 0.0
      %1005 = vadd.xlane.f32.xlu0 %v1004
      %v1006 = vpop.xlane.xlu0 %1005
      %v1007 = vsel %vm1000, %v970, 0.0
      %1008 = vadd.xlane.f32.xlu0 %v1007
      %v1009 = vpop.xlane.xlu0 %1008
      %v1010 = vsel %vm1000, %v971, 0.0
      %1011 = vadd.xlane.f32.xlu0 %v1010
      %v1012 = vpop.xlane.xlu0 %1011
      %v1013 = vsel %vm1000, %v972, 0.0
      %1014 = vadd.xlane.f32.xlu0 %v1013
      %v1015 = vpop.xlane.xlu0 %1014
      %v1016 = vsel %vm1000, %v973, 0.0
      %1017 = vadd.xlane.f32.xlu0 %v1016
      %v1018 = vpop.xlane.xlu0 %1017
      %v1019 = vsel %vm1000, %v974, 0.0
      %1020 = vadd.xlane.f32.xlu0 %v1019
      %v1021 = vpop.xlane.xlu0 %1020
      %v1022 = vsel %vm1000, %v975, 0.0
      %1023 = vadd.xlane.f32.xlu0 %v1022
      %v1024 = vpop.xlane.xlu0 %1023
      %v1025 = vsel %vm1000, %v976, 0.0
      %1026 = vadd.xlane.f32.xlu0 %v1025
      %v1027 = vpop.xlane.xlu0 %1026
      %v1028 = vsel %vm1000, %v977, 0.0
      %1029 = vadd.xlane.f32.xlu0 %v1028
      %v1030 = vpop.xlane.xlu0 %1029
      %v1031 = vsel %vm1000, %v978, 0.0
      %1032 = vadd.xlane.f32.xlu0 %v1031
      %v1033 = vpop.xlane.xlu0 %1032
      %v1034 = vsel %vm1000, %v979, 0.0
      %1035 = vadd.xlane.f32.xlu0 %v1034
      %v1036 = vpop.xlane.xlu0 %1035
      %v1037 = vsel %vm1000, %v980, 0.0
      %1038 = vadd.xlane.f32.xlu0 %v1037
      %v1039 = vpop.xlane.xlu0 %1038
      %v1040 = vsel %vm1000, %v981, 0.0
      %1041 = vadd.xlane.f32.xlu0 %v1040
      %v1042 = vpop.xlane.xlu0 %1041
      %v1043 = vsel %vm1000, %v982, 0.0
      %1044 = vadd.xlane.f32.xlu0 %v1043
      %v1045 = vpop.xlane.xlu0 %1044
      %v1046 = vsel %vm1000, %v983, 0.0
      %1047 = vadd.xlane.f32.xlu0 %v1046
      %v1048 = vpop.xlane.xlu0 %1047
      %v1049 = vsel %vm1000, %v984, 0.0
      %1050 = vadd.xlane.f32.xlu0 %v1049
      %v1051 = vpop.xlane.xlu0 %1050
      %v1052 = vsel %vm1000, %v985, 0.0
      %1053 = vadd.xlane.f32.xlu0 %v1052
      %v1054 = vpop.xlane.xlu0 %1053
      %v1055 = vsel %vm1000, %v986, 0.0
      %1056 = vadd.xlane.f32.xlu0 %v1055
      %v1057 = vpop.xlane.xlu0 %1056
      %v1058 = vsel %vm1000, %v987, 0.0
      %1059 = vadd.xlane.f32.xlu0 %v1058
      %v1060 = vpop.xlane.xlu0 %1059
      %v1061 = vsel %vm1000, %v988, 0.0
      %1062 = vadd.xlane.f32.xlu0 %v1061
      %v1063 = vpop.xlane.xlu0 %1062
      %v1064 = vsel %vm1000, %v989, 0.0
      %1065 = vadd.xlane.f32.xlu0 %v1064
      %v1066 = vpop.xlane.xlu0 %1065
      %v1067 = vsel %vm1000, %v990, 0.0
      %1068 = vadd.xlane.f32.xlu0 %v1067
      %v1069 = vpop.xlane.xlu0 %1068
      %v1070 = vsel %vm1000, %v991, 0.0
      %1071 = vadd.xlane.f32.xlu0 %v1070
      %v1072 = vpop.xlane.xlu0 %1071
      %v1073 = vsel %vm1000, %v992, 0.0
      %1074 = vadd.xlane.f32.xlu0 %v1073
      %v1075 = vpop.xlane.xlu0 %1074
      %v1076 = vsel %vm1000, %v993, 0.0
      %1077 = vadd.xlane.f32.xlu0 %v1076
      %v1078 = vpop.xlane.xlu0 %1077
      %v1079 = vsel %vm1000, %v994, 0.0
      %1080 = vadd.xlane.f32.xlu0 %v1079
      %v1081 = vpop.xlane.xlu0 %1080
      %v1082 = vsel %vm1000, %v995, 0.0
      %1083 = vadd.xlane.f32.xlu0 %v1082
      %v1084 = vpop.xlane.xlu0 %1083
      %v1085 = vsel %vm1000, %v996, 0.0
      %1086 = vadd.xlane.f32.xlu0 %v1085
      %v1087 = vpop.xlane.xlu0 %1086
      %v1088 = vsel %vm1000, %v997, 0.0
      %1089 = vadd.xlane.f32.xlu0 %v1088
      %v1090 = vpop.xlane.xlu0 %1089
      %v1091 = vsel %vm1000, %v998, 0.0
      %1092 = vadd.xlane.f32.xlu0 %v1091
      %v1093 = vpop.xlane.xlu0 %1092
      %v1094 = vsel %vm1000, %v999, 0.0
      %1095 = vadd.xlane.f32.xlu0 %v1094
      %v1096 = vpop.xlane.xlu0 %1095
      %v1097 = vrsqrt.pop %v1003
      %v1098 = vmul.f32 %v1003, %v1097
      %vm1099 = vcmp.eq.f32.partialorder %v1003, inf
      %v1100 = vsel %vm1099, %v1003, %v1098
      %vm1101 = vcmp.eq.f32.partialorder %v1003, 0.0
      %v1102 = vand.u32 %v1003, 2147483648
      %v1103 = vsel %vm1101, %v1102, %v1100
      %v1104 = vrsqrt.pop %v1006
      %v1105 = vmul.f32 %v1006, %v1104
      %vm1106 = vcmp.eq.f32.partialorder %v1006, inf
      %v1107 = vsel %vm1106, %v1006, %v1105
      %vm1108 = vcmp.eq.f32.partialorder %v1006, 0.0
      %v1109 = vand.u32 %v1006, 2147483648
      %v1110 = vsel %vm1108, %v1109, %v1107
      %v1111 = vrsqrt.pop %v1009
      %v1112 = vmul.f32 %v1009, %v1111
      %vm1113 = vcmp.eq.f32.partialorder %v1009, inf
      %v1114 = vsel %vm1113, %v1009, %v1112
      %vm1115 = vcmp.eq.f32.partialorder %v1009, 0.0
      %v1116 = vand.u32 %v1009, 2147483648
      %v1117 = vsel %vm1115, %v1116, %v1114
      %v1118 = vrsqrt.pop %v1012
      %v1119 = vmul.f32 %v1012, %v1118
      %vm1120 = vcmp.eq.f32.partialorder %v1012, inf
      %v1121 = vsel %vm1120, %v1012, %v1119
      %vm1122 = vcmp.eq.f32.partialorder %v1012, 0.0
      %v1123 = vand.u32 %v1012, 2147483648
      %v1124 = vsel %vm1122, %v1123, %v1121
      %v1125 = vrsqrt.pop %v1015
      %v1126 = vmul.f32 %v1015, %v1125
      %vm1127 = vcmp.eq.f32.partialorder %v1015, inf
      %v1128 = vsel %vm1127, %v1015, %v1126
      %vm1129 = vcmp.eq.f32.partialorder %v1015, 0.0
      %v1130 = vand.u32 %v1015, 2147483648
      %v1131 = vsel %vm1129, %v1130, %v1128
      %v1132 = vrsqrt.pop %v1018
      %v1133 = vmul.f32 %v1018, %v1132
      %vm1134 = vcmp.eq.f32.partialorder %v1018, inf
      %v1135 = vsel %vm1134, %v1018, %v1133
      %vm1136 = vcmp.eq.f32.partialorder %v1018, 0.0
      %v1137 = vand.u32 %v1018, 2147483648
      %v1138 = vsel %vm1136, %v1137, %v1135
      %v1139 = vrsqrt.pop %v1021
      %v1140 = vmul.f32 %v1021, %v1139
      %vm1141 = vcmp.eq.f32.partialorder %v1021, inf
      %v1142 = vsel %vm1141, %v1021, %v1140
      %vm1143 = vcmp.eq.f32.partialorder %v1021, 0.0
      %v1144 = vand.u32 %v1021, 2147483648
      %v1145 = vsel %vm1143, %v1144, %v1142
      %v1146 = vrsqrt.pop %v1024
      %v1147 = vmul.f32 %v1024, %v1146
      %vm1148 = vcmp.eq.f32.partialorder %v1024, inf
      %v1149 = vsel %vm1148, %v1024, %v1147
      %vm1150 = vcmp.eq.f32.partialorder %v1024, 0.0
      %v1151 = vand.u32 %v1024, 2147483648
      %v1152 = vsel %vm1150, %v1151, %v1149
      %v1153 = vrsqrt.pop %v1027
      %v1154 = vmul.f32 %v1027, %v1153
      %vm1155 = vcmp.eq.f32.partialorder %v1027, inf
      %v1156 = vsel %vm1155, %v1027, %v1154
      %vm1157 = vcmp.eq.f32.partialorder %v1027, 0.0
      %v1158 = vand.u32 %v1027, 2147483648
      %v1159 = vsel %vm1157, %v1158, %v1156
      %v1160 = vrsqrt.pop %v1030
      %v1161 = vmul.f32 %v1030, %v1160
      %vm1162 = vcmp.eq.f32.partialorder %v1030, inf
      %v1163 = vsel %vm1162, %v1030, %v1161
      %vm1164 = vcmp.eq.f32.partialorder %v1030, 0.0
      %v1165 = vand.u32 %v1030, 2147483648
      %v1166 = vsel %vm1164, %v1165, %v1163
      %v1167 = vrsqrt.pop %v1033
      %v1168 = vmul.f32 %v1033, %v1167
      %vm1169 = vcmp.eq.f32.partialorder %v1033, inf
      %v1170 = vsel %vm1169, %v1033, %v1168
      %vm1171 = vcmp.eq.f32.partialorder %v1033, 0.0
      %v1172 = vand.u32 %v1033, 2147483648
      %v1173 = vsel %vm1171, %v1172, %v1170
      %v1174 = vrsqrt.pop %v1036
      %v1175 = vmul.f32 %v1036, %v1174
      %vm1176 = vcmp.eq.f32.partialorder %v1036, inf
      %v1177 = vsel %vm1176, %v1036, %v1175
      %vm1178 = vcmp.eq.f32.partialorder %v1036, 0.0
      %v1179 = vand.u32 %v1036, 2147483648
      %v1180 = vsel %vm1178, %v1179, %v1177
      %v1181 = vrsqrt.pop %v1039
      %v1182 = vmul.f32 %v1039, %v1181
      %vm1183 = vcmp.eq.f32.partialorder %v1039, inf
      %v1184 = vsel %vm1183, %v1039, %v1182
      %vm1185 = vcmp.eq.f32.partialorder %v1039, 0.0
      %v1186 = vand.u32 %v1039, 2147483648
      %v1187 = vsel %vm1185, %v1186, %v1184
      %v1188 = vrsqrt.pop %v1042
      %v1189 = vmul.f32 %v1042, %v1188
      %vm1190 = vcmp.eq.f32.partialorder %v1042, inf
      %v1191 = vsel %vm1190, %v1042, %v1189
      %vm1192 = vcmp.eq.f32.partialorder %v1042, 0.0
      %v1193 = vand.u32 %v1042, 2147483648
      %v1194 = vsel %vm1192, %v1193, %v1191
      %v1195 = vrsqrt.pop %v1045
      %v1196 = vmul.f32 %v1045, %v1195
      %vm1197 = vcmp.eq.f32.partialorder %v1045, inf
      %v1198 = vsel %vm1197, %v1045, %v1196
      %vm1199 = vcmp.eq.f32.partialorder %v1045, 0.0
      %v1200 = vand.u32 %v1045, 2147483648
      %v1201 = vsel %vm1199, %v1200, %v1198
      %v1202 = vrsqrt.pop %v1048
      %v1203 = vmul.f32 %v1048, %v1202
      %vm1204 = vcmp.eq.f32.partialorder %v1048, inf
      %v1205 = vsel %vm1204, %v1048, %v1203
      %vm1206 = vcmp.eq.f32.partialorder %v1048, 0.0
      %v1207 = vand.u32 %v1048, 2147483648
      %v1208 = vsel %vm1206, %v1207, %v1205
      %v1209 = vrsqrt.pop %v1051
      %v1210 = vmul.f32 %v1051, %v1209
      %vm1211 = vcmp.eq.f32.partialorder %v1051, inf
      %v1212 = vsel %vm1211, %v1051, %v1210
      %vm1213 = vcmp.eq.f32.partialorder %v1051, 0.0
      %v1214 = vand.u32 %v1051, 2147483648
      %v1215 = vsel %vm1213, %v1214, %v1212
      %v1216 = vrsqrt.pop %v1054
      %v1217 = vmul.f32 %v1054, %v1216
      %vm1218 = vcmp.eq.f32.partialorder %v1054, inf
      %v1219 = vsel %vm1218, %v1054, %v1217
      %vm1220 = vcmp.eq.f32.partialorder %v1054, 0.0
      %v1221 = vand.u32 %v1054, 2147483648
      %v1222 = vsel %vm1220, %v1221, %v1219
      %v1223 = vrsqrt.pop %v1057
      %v1224 = vmul.f32 %v1057, %v1223
      %vm1225 = vcmp.eq.f32.partialorder %v1057, inf
      %v1226 = vsel %vm1225, %v1057, %v1224
      %vm1227 = vcmp.eq.f32.partialorder %v1057, 0.0
      %v1228 = vand.u32 %v1057, 2147483648
      %v1229 = vsel %vm1227, %v1228, %v1226
      %v1230 = vrsqrt.pop %v1060
      %v1231 = vmul.f32 %v1060, %v1230
      %vm1232 = vcmp.eq.f32.partialorder %v1060, inf
      %v1233 = vsel %vm1232, %v1060, %v1231
      %vm1234 = vcmp.eq.f32.partialorder %v1060, 0.0
      %v1235 = vand.u32 %v1060, 2147483648
      %v1236 = vsel %vm1234, %v1235, %v1233
      %v1237 = vrsqrt.pop %v1063
      %v1238 = vmul.f32 %v1063, %v1237
      %vm1239 = vcmp.eq.f32.partialorder %v1063, inf
      %v1240 = vsel %vm1239, %v1063, %v1238
      %vm1241 = vcmp.eq.f32.partialorder %v1063, 0.0
      %v1242 = vand.u32 %v1063, 2147483648
      %v1243 = vsel %vm1241, %v1242, %v1240
      %v1244 = vrsqrt.pop %v1066
      %v1245 = vmul.f32 %v1066, %v1244
      %vm1246 = vcmp.eq.f32.partialorder %v1066, inf
      %v1247 = vsel %vm1246, %v1066, %v1245
      %vm1248 = vcmp.eq.f32.partialorder %v1066, 0.0
      %v1249 = vand.u32 %v1066, 2147483648
      %v1250 = vsel %vm1248, %v1249, %v1247
      %v1251 = vrsqrt.pop %v1069
      %v1252 = vmul.f32 %v1069, %v1251
      %vm1253 = vcmp.eq.f32.partialorder %v1069, inf
      %v1254 = vsel %vm1253, %v1069, %v1252
      %vm1255 = vcmp.eq.f32.partialorder %v1069, 0.0
      %v1256 = vand.u32 %v1069, 2147483648
      %v1257 = vsel %vm1255, %v1256, %v1254
      %v1258 = vrsqrt.pop %v1072
      %v1259 = vmul.f32 %v1072, %v1258
      %vm1260 = vcmp.eq.f32.partialorder %v1072, inf
      %v1261 = vsel %vm1260, %v1072, %v1259
      %vm1262 = vcmp.eq.f32.partialorder %v1072, 0.0
      %v1263 = vand.u32 %v1072, 2147483648
      %v1264 = vsel %vm1262, %v1263, %v1261
      %v1265 = vrsqrt.pop %v1075
      %v1266 = vmul.f32 %v1075, %v1265
      %vm1267 = vcmp.eq.f32.partialorder %v1075, inf
      %v1268 = vsel %vm1267, %v1075, %v1266
      %vm1269 = vcmp.eq.f32.partialorder %v1075, 0.0
      %v1270 = vand.u32 %v1075, 2147483648
      %v1271 = vsel %vm1269, %v1270, %v1268
      %v1272 = vrsqrt.pop %v1078
      %v1273 = vmul.f32 %v1078, %v1272
      %vm1274 = vcmp.eq.f32.partialorder %v1078, inf
      %v1275 = vsel %vm1274, %v1078, %v1273
      %vm1276 = vcmp.eq.f32.partialorder %v1078, 0.0
      %v1277 = vand.u32 %v1078, 2147483648
      %v1278 = vsel %vm1276, %v1277, %v1275
      %v1279 = vrsqrt.pop %v1081
      %v1280 = vmul.f32 %v1081, %v1279
      %vm1281 = vcmp.eq.f32.partialorder %v1081, inf
      %v1282 = vsel %vm1281, %v1081, %v1280
      %vm1283 = vcmp.eq.f32.partialorder %v1081, 0.0
      %v1284 = vand.u32 %v1081, 2147483648
      %v1285 = vsel %vm1283, %v1284, %v1282
      %v1286 = vrsqrt.pop %v1084
      %v1287 = vmul.f32 %v1084, %v1286
      %vm1288 = vcmp.eq.f32.partialorder %v1084, inf
      %v1289 = vsel %vm1288, %v1084, %v1287
      %vm1290 = vcmp.eq.f32.partialorder %v1084, 0.0
      %v1291 = vand.u32 %v1084, 2147483648
      %v1292 = vsel %vm1290, %v1291, %v1289
      %v1293 = vrsqrt.pop %v1087
      %v1294 = vmul.f32 %v1087, %v1293
      %vm1295 = vcmp.eq.f32.partialorder %v1087, inf
      %v1296 = vsel %vm1295, %v1087, %v1294
      %vm1297 = vcmp.eq.f32.partialorder %v1087, 0.0
      %v1298 = vand.u32 %v1087, 2147483648
      %v1299 = vsel %vm1297, %v1298, %v1296
      %v1300 = vrsqrt.pop %v1090
      %v1301 = vmul.f32 %v1090, %v1300
      %vm1302 = vcmp.eq.f32.partialorder %v1090, inf
      %v1303 = vsel %vm1302, %v1090, %v1301
      %vm1304 = vcmp.eq.f32.partialorder %v1090, 0.0
      %v1305 = vand.u32 %v1090, 2147483648
      %v1306 = vsel %vm1304, %v1305, %v1303
      %v1307 = vrsqrt.pop %v1093
      %v1308 = vmul.f32 %v1093, %v1307
      %vm1309 = vcmp.eq.f32.partialorder %v1093, inf
      %v1310 = vsel %vm1309, %v1093, %v1308
      %vm1311 = vcmp.eq.f32.partialorder %v1093, 0.0
      %v1312 = vand.u32 %v1093, 2147483648
      %v1313 = vsel %vm1311, %v1312, %v1310
      %v1314 = vrsqrt.pop %v1096
      %v1315 = vmul.f32 %v1096, %v1314
      %vm1316 = vcmp.eq.f32.partialorder %v1096, inf
      %v1317 = vsel %vm1316, %v1096, %v1315
      %vm1318 = vcmp.eq.f32.partialorder %v1096, 0.0
      %v1319 = vand.u32 %v1096, 2147483648
      %v1320 = vsel %vm1318, %v1319, %v1317
      %v1321 = vld [vmem:[%s3] sm:$0x1]
      %v1323 = vlaneseq
      %v1324 = vshrl.u32 %v1323, 7
      %v1325 = vsub.s32 0, %v1324
      %v1326 = vrot.slane %v1321, %v1325
      %v1328 = vsub.f32 %v1103, %v1326
      %v1329 = vsub.f32 %v1110, %v1326
      %v1330 = vsub.f32 %v1117, %v1326
      %v1331 = vsub.f32 %v1124, %v1326
      %v1332 = vsub.f32 %v1131, %v1326
      %v1333 = vsub.f32 %v1138, %v1326
      %v1334 = vsub.f32 %v1145, %v1326
      %v1335 = vsub.f32 %v1152, %v1326
      %v1336 = vsub.f32 %v1159, %v1326
      %v1337 = vsub.f32 %v1166, %v1326
      %v1338 = vsub.f32 %v1173, %v1326
      %v1339 = vsub.f32 %v1180, %v1326
      %v1340 = vsub.f32 %v1187, %v1326
      %v1341 = vsub.f32 %v1194, %v1326
      %v1342 = vsub.f32 %v1201, %v1326
      %v1343 = vsub.f32 %v1208, %v1326
      %v1344 = vsub.f32 %v1215, %v1326
      %v1345 = vsub.f32 %v1222, %v1326
      %v1346 = vsub.f32 %v1229, %v1326
      %v1347 = vsub.f32 %v1236, %v1326
      %v1348 = vsub.f32 %v1243, %v1326
      %v1349 = vsub.f32 %v1250, %v1326
      %v1350 = vsub.f32 %v1257, %v1326
      %v1351 = vsub.f32 %v1264, %v1326
      %v1352 = vsub.f32 %v1271, %v1326
      %v1353 = vsub.f32 %v1278, %v1326
      %v1354 = vsub.f32 %v1285, %v1326
      %v1355 = vsub.f32 %v1292, %v1326
      %v1356 = vsub.f32 %v1299, %v1326
      %v1357 = vsub.f32 %v1306, %v1326
      %v1358 = vsub.f32 %v1313, %v1326
      %v1359 = vsub.f32 %v1320, %v1326
      %v1360 = vmul.f32 %v1328, %v1328
      %v1361 = vmul.f32 %v1329, %v1329
      %v1362 = vmul.f32 %v1330, %v1330
      %v1363 = vmul.f32 %v1331, %v1331
      %v1364 = vmul.f32 %v1332, %v1332
      %v1365 = vmul.f32 %v1333, %v1333
      %v1366 = vmul.f32 %v1334, %v1334
      %v1367 = vmul.f32 %v1335, %v1335
      %v1368 = vmul.f32 %v1336, %v1336
      %v1369 = vmul.f32 %v1337, %v1337
      %v1370 = vmul.f32 %v1338, %v1338
      %v1371 = vmul.f32 %v1339, %v1339
      %v1372 = vmul.f32 %v1340, %v1340
      %v1373 = vmul.f32 %v1341, %v1341
      %v1374 = vmul.f32 %v1342, %v1342
      %v1375 = vmul.f32 %v1343, %v1343
      %v1376 = vmul.f32 %v1344, %v1344
      %v1377 = vmul.f32 %v1345, %v1345
      %v1378 = vmul.f32 %v1346, %v1346
      %v1379 = vmul.f32 %v1347, %v1347
      %v1380 = vmul.f32 %v1348, %v1348
      %v1381 = vmul.f32 %v1349, %v1349
      %v1382 = vmul.f32 %v1350, %v1350
      %v1383 = vmul.f32 %v1351, %v1351
      %v1384 = vmul.f32 %v1352, %v1352
      %v1385 = vmul.f32 %v1353, %v1353
      %v1386 = vmul.f32 %v1354, %v1354
      %v1387 = vmul.f32 %v1355, %v1355
      %v1388 = vmul.f32 %v1356, %v1356
      %v1389 = vmul.f32 %v1357, %v1357
      %v1390 = vmul.f32 %v1358, %v1358
      %v1391 = vmul.f32 %v1359, %v1359
      %v1392 = vmul.f32 %v1360, -1.805
      %v1393 = vmul.f32 %v1361, -1.805
      %v1394 = vmul.f32 %v1362, -1.805
      %v1395 = vmul.f32 %v1363, -1.805
      %v1396 = vmul.f32 %v1364, -1.805
      %v1397 = vmul.f32 %v1365, -1.805
      %v1398 = vmul.f32 %v1366, -1.805
      %v1399 = vmul.f32 %v1367, -1.805
      %v1400 = vmul.f32 %v1368, -1.805
      %v1401 = vmul.f32 %v1369, -1.805
      %v1402 = vmul.f32 %v1370, -1.805
      %v1403 = vmul.f32 %v1371, -1.805
      %v1404 = vmul.f32 %v1372, -1.805
      %v1405 = vmul.f32 %v1373, -1.805
      %v1406 = vmul.f32 %v1374, -1.805
      %v1407 = vmul.f32 %v1375, -1.805
      %v1408 = vmul.f32 %v1376, -1.805
      %v1409 = vmul.f32 %v1377, -1.805
      %v1410 = vmul.f32 %v1378, -1.805
      %v1411 = vmul.f32 %v1379, -1.805
      %v1412 = vmul.f32 %v1380, -1.805
      %v1413 = vmul.f32 %v1381, -1.805
      %v1414 = vmul.f32 %v1382, -1.805
      %v1415 = vmul.f32 %v1383, -1.805
      %v1416 = vmul.f32 %v1384, -1.805
      %v1417 = vmul.f32 %v1385, -1.805
      %v1418 = vmul.f32 %v1386, -1.805
      %v1419 = vmul.f32 %v1387, -1.805
      %v1420 = vmul.f32 %v1388, -1.805
      %v1421 = vmul.f32 %v1389, -1.805
      %v1422 = vmul.f32 %v1390, -1.805
      %v1423 = vmul.f32 %v1391, -1.805
      %v1424 = vmul.f32 %v1392, 1.442695
      %v1425 = vpow.pop %v1424
      %v1426 = vmul.f32 %v1393, 1.442695
      %v1427 = vpow.pop %v1426
      %v1428 = vmul.f32 %v1394, 1.442695
      %v1429 = vpow.pop %v1428
      %v1430 = vmul.f32 %v1395, 1.442695
      %v1431 = vpow.pop %v1430
      %v1432 = vmul.f32 %v1396, 1.442695
      %v1433 = vpow.pop %v1432
      %v1434 = vmul.f32 %v1397, 1.442695
      %v1435 = vpow.pop %v1434
      %v1436 = vmul.f32 %v1398, 1.442695
      %v1437 = vpow.pop %v1436
      %v1438 = vmul.f32 %v1399, 1.442695
      %v1439 = vpow.pop %v1438
      %v1440 = vmul.f32 %v1400, 1.442695
      %v1441 = vpow.pop %v1440
      %v1442 = vmul.f32 %v1401, 1.442695
      %v1443 = vpow.pop %v1442
      %v1444 = vmul.f32 %v1402, 1.442695
      %v1445 = vpow.pop %v1444
      %v1446 = vmul.f32 %v1403, 1.442695
      %v1447 = vpow.pop %v1446
      %v1448 = vmul.f32 %v1404, 1.442695
      %v1449 = vpow.pop %v1448
      %v1450 = vmul.f32 %v1405, 1.442695
      %v1451 = vpow.pop %v1450
      %v1452 = vmul.f32 %v1406, 1.442695
      %v1453 = vpow.pop %v1452
      %v1454 = vmul.f32 %v1407, 1.442695
      %v1455 = vpow.pop %v1454
      %v1456 = vmul.f32 %v1408, 1.442695
      %v1457 = vpow.pop %v1456
      %v1458 = vmul.f32 %v1409, 1.442695
      %v1459 = vpow.pop %v1458
      %v1460 = vmul.f32 %v1410, 1.442695
      %v1461 = vpow.pop %v1460
      %v1462 = vmul.f32 %v1411, 1.442695
      %v1463 = vpow.pop %v1462
      %v1464 = vmul.f32 %v1412, 1.442695
      %v1465 = vpow.pop %v1464
      %v1466 = vmul.f32 %v1413, 1.442695
      %v1467 = vpow.pop %v1466
      %v1468 = vmul.f32 %v1414, 1.442695
      %v1469 = vpow.pop %v1468
      %v1470 = vmul.f32 %v1415, 1.442695
      %v1471 = vpow.pop %v1470
      %v1472 = vmul.f32 %v1416, 1.442695
      %v1473 = vpow.pop %v1472
      %v1474 = vmul.f32 %v1417, 1.442695
      %v1475 = vpow.pop %v1474
      %v1476 = vmul.f32 %v1418, 1.442695
      %v1477 = vpow.pop %v1476
      %v1478 = vmul.f32 %v1419, 1.442695
      %v1479 = vpow.pop %v1478
      %v1480 = vmul.f32 %v1420, 1.442695
      %v1481 = vpow.pop %v1480
      %v1482 = vmul.f32 %v1421, 1.442695
      %v1483 = vpow.pop %v1482
      %v1484 = vmul.f32 %v1422, 1.442695
      %v1485 = vpow.pop %v1484
      %v1486 = vmul.f32 %v1423, 1.442695
      %v1487 = vpow.pop %v1486
      %v1488 = vld [vmem:[%s4] sm:$0xff]
      %v1489 = vld [vmem:[%s4 + $0x8] sm:$0xff]
      %v1490 = vld [vmem:[%s4 + $0x10] sm:$0xf]
      %1523 = vrot.lane.b32.xlu0 %v810, 125
      %v1524 = vpop.permute.xlu0 %1523
      %1525 = vrot.lane.b32.xlu0 %v815, 125
      %v1526 = vpop.permute.xlu0 %1525
      %1527 = vrot.lane.b32.xlu0 %v820, 125
      %v1528 = vpop.permute.xlu0 %1527
      %1529 = vrot.lane.b32.xlu0 %v825, 125
      %v1530 = vpop.permute.xlu0 %1529
      %1531 = vrot.lane.b32.xlu0 %v830, 125
      %v1532 = vpop.permute.xlu0 %1531
      %1533 = vrot.lane.b32.xlu0 %v835, 125
      %v1534 = vpop.permute.xlu0 %1533
      %1535 = vrot.lane.b32.xlu0 %v840, 125
      %v1536 = vpop.permute.xlu0 %1535
      %1537 = vrot.lane.b32.xlu0 %v845, 125
      %v1538 = vpop.permute.xlu0 %1537
      %1539 = vrot.lane.b32.xlu0 %v850, 125
      %v1540 = vpop.permute.xlu0 %1539
      %1541 = vrot.lane.b32.xlu0 %v855, 125
      %v1542 = vpop.permute.xlu0 %1541
      %1543 = vrot.lane.b32.xlu0 %v860, 125
      %v1544 = vpop.permute.xlu0 %1543
      %1545 = vrot.lane.b32.xlu0 %v865, 125
      %v1546 = vpop.permute.xlu0 %1545
      %1547 = vrot.lane.b32.xlu0 %v870, 125
      %v1548 = vpop.permute.xlu0 %1547
      %1549 = vrot.lane.b32.xlu0 %v875, 125
      %v1550 = vpop.permute.xlu0 %1549
      %1551 = vrot.lane.b32.xlu0 %v880, 125
      %v1552 = vpop.permute.xlu0 %1551
      %1553 = vrot.lane.b32.xlu0 %v885, 125
      %v1554 = vpop.permute.xlu0 %1553
      %1555 = vrot.lane.b32.xlu0 %v890, 125
      %v1556 = vpop.permute.xlu0 %1555
      %1557 = vrot.lane.b32.xlu0 %v895, 125
      %v1558 = vpop.permute.xlu0 %1557
      %1559 = vrot.lane.b32.xlu0 %v900, 125
      %v1560 = vpop.permute.xlu0 %1559
      %1561 = vrot.lane.b32.xlu0 %v905, 125
      %v1562 = vpop.permute.xlu0 %1561
      %1563 = vrot.lane.b32.xlu0 %v910, 125
      %v1564 = vpop.permute.xlu0 %1563
      %1565 = vrot.lane.b32.xlu0 %v915, 125
      %v1566 = vpop.permute.xlu0 %1565
      %1567 = vrot.lane.b32.xlu0 %v920, 125
      %v1568 = vpop.permute.xlu0 %1567
      %1569 = vrot.lane.b32.xlu0 %v925, 125
      %v1570 = vpop.permute.xlu0 %1569
      %1571 = vrot.lane.b32.xlu0 %v930, 125
      %v1572 = vpop.permute.xlu0 %1571
      %1573 = vrot.lane.b32.xlu0 %v935, 125
      %v1574 = vpop.permute.xlu0 %1573
      %1575 = vrot.lane.b32.xlu0 %v940, 125
      %v1576 = vpop.permute.xlu0 %1575
      %1577 = vrot.lane.b32.xlu0 %v945, 125
      %v1578 = vpop.permute.xlu0 %1577
      %1579 = vrot.lane.b32.xlu0 %v950, 125
      %v1580 = vpop.permute.xlu0 %1579
      %1581 = vrot.lane.b32.xlu0 %v955, 125
      %v1582 = vpop.permute.xlu0 %1581
      %1583 = vrot.lane.b32.xlu0 %v960, 125
      %v1584 = vpop.permute.xlu0 %1583
      %1585 = vrot.lane.b32.xlu0 %v965, 125
      %v1586 = vpop.permute.xlu0 %1585
      %vm1619 = vcmask 162816
      %v1621 = vsel %vm1619, %v1425, 0
      %v1624 = vsel %vm1619, %v1427, 0
      %v1627 = vsel %vm1619, %v1429, 0
      %v1630 = vsel %vm1619, %v1431, 0
      %v1633 = vsel %vm1619, %v1433, 0
      %v1636 = vsel %vm1619, %v1435, 0
      %v1639 = vsel %vm1619, %v1437, 0
      %v1642 = vsel %vm1619, %v1439, 0
      %v1645 = vsel %vm1619, %v1441, 0
      %v1648 = vsel %vm1619, %v1443, 0
      %v1651 = vsel %vm1619, %v1445, 0
      %v1654 = vsel %vm1619, %v1447, 0
      %v1657 = vsel %vm1619, %v1449, 0
      %v1660 = vsel %vm1619, %v1451, 0
      %v1663 = vsel %vm1619, %v1453, 0
      %v1666 = vsel %vm1619, %v1455, 0
      %v1669 = vsel %vm1619, %v1457, 0
      %v1672 = vsel %vm1619, %v1459, 0
      %v1675 = vsel %vm1619, %v1461, 0
      %v1678 = vsel %vm1619, %v1463, 0
      %v1681 = vsel %vm1619, %v1465, 0
      %v1684 = vsel %vm1619, %v1467, 0
      %v1687 = vsel %vm1619, %v1469, 0
      %v1690 = vsel %vm1619, %v1471, 0
      %v1693 = vsel %vm1619, %v1473, 0
      %v1696 = vsel %vm1619, %v1475, 0
      %v1699 = vsel %vm1619, %v1477, 0
      %v1702 = vsel %vm1619, %v1479, 0
      %v1705 = vsel %vm1619, %v1481, 0
      %v1708 = vsel %vm1619, %v1483, 0
      %v1711 = vsel %vm1619, %v1485, 0
      %v1714 = vsel %vm1619, %v1487, 0
      %vm1716 = vcmask 1043456
      %v1718 = vsel %vm1716, %v1490, 0
      %1720 = vmatprep.subr.mxu0 0.0
      %1721 = vmatpush1.msra.mxu0 0.0
      %1722 = vmatprep.subr.mxu0 0.0
      %1723 = vmatpush1.msra.mxu0 0.0
      %1724 = vmatprep.subr.mxu0 0.0
      %1725 = vmatpush1.msra.mxu0 0.0
      %1726 = vmatprep.subr.mxu0 0.0
      %1727 = vmatpush1.msra.mxu0 0.0
      %1728 = vmatprep.subr.mxu0 0.0
      %1729 = vmatpush1.msra.mxu0 0.0
      %1730 = vmatprep.subr.mxu0 0.0
      %1731 = vmatpush1.msra.mxu0 0.0
      %1732 = vmatprep.subr.mxu0 0.0
      %1733 = vmatpush1.msra.mxu0 0.0
      %1734 = vmatprep.subr.mxu0 0.0
      %1735 = vmatpush1.msra.mxu0 0.0
      %1736 = vmatprep.subr.mxu0 0.0
      %1737 = vmatpush1.msra.mxu0 0.0
      %1738 = vmatprep.subr.mxu0 0.0
      %1739 = vmatpush1.msra.mxu0 0.0
      %1740 = vmatprep.subr.mxu0 0.0
      %1741 = vmatpush1.msra.mxu0 0.0
      %1742 = vmatprep.subr.mxu0 0.0
      %1743 = vmatpush1.msra.mxu0 0.0
      %1744 = vmatprep.subr.mxu0 0.0
      %1745 = vmatpush1.msra.mxu0 0.0
      %1746 = vmatprep.subr.mxu0 0.0
      %1747 = vmatpush1.msra.mxu0 %v1718
      %1748 = vmatprep.subr.mxu0 0.0
      %1749 = vmatpush1.msra.mxu0 %v1489
      %1750 = vmatprep.subr.mxu0 0.0
      %1751 = vmatpush1.msra.mxu0 %v1488
      %1752 = vmatprep.subr.mxu0 0.0
      %1753 = vmatpush2.msra.mxu0 0.0
      %1754 = vmatprep.subr.mxu0 0.0
      %1755 = vmatpush2.msra.mxu0 0.0
      %1756 = vmatprep.subr.mxu0 0.0
      %1757 = vmatpush2.msra.mxu0 0.0
      %1758 = vmatprep.subr.mxu0 0.0
      %1759 = vmatpush2.msra.mxu0 0.0
      %1760 = vmatprep.subr.mxu0 0.0
      %1761 = vmatpush2.msra.mxu0 0.0
      %1762 = vmatprep.subr.mxu0 0.0
      %1763 = vmatpush2.msra.mxu0 0.0
      %1764 = vmatprep.subr.mxu0 0.0
      %1765 = vmatpush2.msra.mxu0 0.0
      %1766 = vmatprep.subr.mxu0 0.0
      %1767 = vmatpush2.msra.mxu0 0.0
      %1768 = vmatprep.subr.mxu0 0.0
      %1769 = vmatpush2.msra.mxu0 0.0
      %1770 = vmatprep.subr.mxu0 0.0
      %1771 = vmatpush2.msra.mxu0 0.0
      %1772 = vmatprep.subr.mxu0 0.0
      %1773 = vmatpush2.msra.mxu0 0.0
      %1774 = vmatprep.subr.mxu0 0.0
      %1775 = vmatpush2.msra.mxu0 0.0
      %1776 = vmatprep.subr.mxu0 0.0
      %1777 = vmatpush2.msra.mxu0 0.0
      %1778 = vmatprep.subr.mxu0 0.0
      %1779 = vmatpush2.msra.mxu0 0.0
      %1780 = vmatprep.subr.mxu0 0.0
      %1781 = vmatpush2.msra.mxu0 0.0
      %1782 = vmatprep.subr.mxu0 0.0
      %1783 = vmatpush2.msra.mxu0 0.0
      %1784 = vmatprep.mubr.f32.mxu0 0.0
      %1785 = vmatmul.mubr.f32.gmra.mxu0 %v1621
      %v1786 = vpop.f32.mrf.mxu0
      %v1787 = vadd.f32 %v1524, %v1786
      %v1788 = vpop.f32.mrf.mxu0
      %1789 = vmatprep.mubr.f32.mxu0 0.0
      %1790 = vmatmul.mubr.f32.gmra.mxu0 %v1624
      %v1791 = vpop.f32.mrf.mxu0
      %v1792 = vadd.f32 %v1526, %v1791
      %v1793 = vpop.f32.mrf.mxu0
      %1794 = vmatprep.mubr.f32.mxu0 0.0
      %1795 = vmatmul.mubr.f32.gmra.mxu0 %v1627
      %v1796 = vpop.f32.mrf.mxu0
      %v1797 = vadd.f32 %v1528, %v1796
      %v1798 = vpop.f32.mrf.mxu0
      %1799 = vmatprep.mubr.f32.mxu0 0.0
      %1800 = vmatmul.mubr.f32.gmra.mxu0 %v1630
      %v1801 = vpop.f32.mrf.mxu0
      %v1802 = vadd.f32 %v1530, %v1801
      %v1803 = vpop.f32.mrf.mxu0
      %1804 = vmatprep.mubr.f32.mxu0 0.0
      %1805 = vmatmul.mubr.f32.gmra.mxu0 %v1633
      %v1806 = vpop.f32.mrf.mxu0
      %v1807 = vadd.f32 %v1532, %v1806
      %v1808 = vpop.f32.mrf.mxu0
      %1809 = vmatprep.mubr.f32.mxu0 0.0
      %1810 = vmatmul.mubr.f32.gmra.mxu0 %v1636
      %v1811 = vpop.f32.mrf.mxu0
      %v1812 = vadd.f32 %v1534, %v1811
      %v1813 = vpop.f32.mrf.mxu0
      %1814 = vmatprep.mubr.f32.mxu0 0.0
      %1815 = vmatmul.mubr.f32.gmra.mxu0 %v1639
      %v1816 = vpop.f32.mrf.mxu0
      %v1817 = vadd.f32 %v1536, %v1816
      %v1818 = vpop.f32.mrf.mxu0
      %1819 = vmatprep.mubr.f32.mxu0 0.0
      %1820 = vmatmul.mubr.f32.gmra.mxu0 %v1642
      %v1821 = vpop.f32.mrf.mxu0
      %v1822 = vadd.f32 %v1538, %v1821
      %v1823 = vpop.f32.mrf.mxu0
      %1824 = vmatprep.mubr.f32.mxu0 0.0
      %1825 = vmatmul.mubr.f32.gmra.mxu0 %v1645
      %v1826 = vpop.f32.mrf.mxu0
      %v1827 = vadd.f32 %v1540, %v1826
      %v1828 = vpop.f32.mrf.mxu0
      %1829 = vmatprep.mubr.f32.mxu0 0.0
      %1830 = vmatmul.mubr.f32.gmra.mxu0 %v1648
      %v1831 = vpop.f32.mrf.mxu0
      %v1832 = vadd.f32 %v1542, %v1831
      %v1833 = vpop.f32.mrf.mxu0
      %1834 = vmatprep.mubr.f32.mxu0 0.0
      %1835 = vmatmul.mubr.f32.gmra.mxu0 %v1651
      %v1836 = vpop.f32.mrf.mxu0
      %v1837 = vadd.f32 %v1544, %v1836
      %v1838 = vpop.f32.mrf.mxu0
      %1839 = vmatprep.mubr.f32.mxu0 0.0
      %1840 = vmatmul.mubr.f32.gmra.mxu0 %v1654
      %v1841 = vpop.f32.mrf.mxu0
      %v1842 = vadd.f32 %v1546, %v1841
      %v1843 = vpop.f32.mrf.mxu0
      %1844 = vmatprep.mubr.f32.mxu0 0.0
      %1845 = vmatmul.mubr.f32.gmra.mxu0 %v1657
      %v1846 = vpop.f32.mrf.mxu0
      %v1847 = vadd.f32 %v1548, %v1846
      %v1848 = vpop.f32.mrf.mxu0
      %1849 = vmatprep.mubr.f32.mxu0 0.0
      %1850 = vmatmul.mubr.f32.gmra.mxu0 %v1660
      %v1851 = vpop.f32.mrf.mxu0
      %v1852 = vadd.f32 %v1550, %v1851
      %v1853 = vpop.f32.mrf.mxu0
      %1854 = vmatprep.mubr.f32.mxu0 0.0
      %1855 = vmatmul.mubr.f32.gmra.mxu0 %v1663
      %v1856 = vpop.f32.mrf.mxu0
      %v1857 = vadd.f32 %v1552, %v1856
      %v1858 = vpop.f32.mrf.mxu0
      %1859 = vmatprep.mubr.f32.mxu0 0.0
      %1860 = vmatmul.mubr.f32.gmra.mxu0 %v1666
      %v1861 = vpop.f32.mrf.mxu0
      %v1862 = vadd.f32 %v1554, %v1861
      %v1863 = vpop.f32.mrf.mxu0
      %1864 = vmatprep.mubr.f32.mxu0 0.0
      %1865 = vmatmul.mubr.f32.gmra.mxu0 %v1669
      %v1866 = vpop.f32.mrf.mxu0
      %v1867 = vadd.f32 %v1556, %v1866
      %v1868 = vpop.f32.mrf.mxu0
      %1869 = vmatprep.mubr.f32.mxu0 0.0
      %1870 = vmatmul.mubr.f32.gmra.mxu0 %v1672
      %v1871 = vpop.f32.mrf.mxu0
      %v1872 = vadd.f32 %v1558, %v1871
      %v1873 = vpop.f32.mrf.mxu0
      %1874 = vmatprep.mubr.f32.mxu0 0.0
      %1875 = vmatmul.mubr.f32.gmra.mxu0 %v1675
      %v1876 = vpop.f32.mrf.mxu0
      %v1877 = vadd.f32 %v1560, %v1876
      %v1878 = vpop.f32.mrf.mxu0
      %1879 = vmatprep.mubr.f32.mxu0 0.0
      %1880 = vmatmul.mubr.f32.gmra.mxu0 %v1678
      %v1881 = vpop.f32.mrf.mxu0
      %v1882 = vadd.f32 %v1562, %v1881
      %v1883 = vpop.f32.mrf.mxu0
      %1884 = vmatprep.mubr.f32.mxu0 0.0
      %1885 = vmatmul.mubr.f32.gmra.mxu0 %v1681
      %v1886 = vpop.f32.mrf.mxu0
      %v1887 = vadd.f32 %v1564, %v1886
      %v1888 = vpop.f32.mrf.mxu0
      %1889 = vmatprep.mubr.f32.mxu0 0.0
      %1890 = vmatmul.mubr.f32.gmra.mxu0 %v1684
      %v1891 = vpop.f32.mrf.mxu0
      %v1892 = vadd.f32 %v1566, %v1891
      %v1893 = vpop.f32.mrf.mxu0
      %1894 = vmatprep.mubr.f32.mxu0 0.0
      %1895 = vmatmul.mubr.f32.gmra.mxu0 %v1687
      %v1896 = vpop.f32.mrf.mxu0
      %v1897 = vadd.f32 %v1568, %v1896
      %v1898 = vpop.f32.mrf.mxu0
      %1899 = vmatprep.mubr.f32.mxu0 0.0
      %1900 = vmatmul.mubr.f32.gmra.mxu0 %v1690
      %v1901 = vpop.f32.mrf.mxu0
      %v1902 = vadd.f32 %v1570, %v1901
      %v1903 = vpop.f32.mrf.mxu0
      %1904 = vmatprep.mubr.f32.mxu0 0.0
      %1905 = vmatmul.mubr.f32.gmra.mxu0 %v1693
      %v1906 = vpop.f32.mrf.mxu0
      %v1907 = vadd.f32 %v1572, %v1906
      %v1908 = vpop.f32.mrf.mxu0
      %1909 = vmatprep.mubr.f32.mxu0 0.0
      %1910 = vmatmul.mubr.f32.gmra.mxu0 %v1696
      %v1911 = vpop.f32.mrf.mxu0
      %v1912 = vadd.f32 %v1574, %v1911
      %v1913 = vpop.f32.mrf.mxu0
      %1914 = vmatprep.mubr.f32.mxu0 0.0
      %1915 = vmatmul.mubr.f32.gmra.mxu0 %v1699
      %v1916 = vpop.f32.mrf.mxu0
      %v1917 = vadd.f32 %v1576, %v1916
      %v1918 = vpop.f32.mrf.mxu0
      %1919 = vmatprep.mubr.f32.mxu0 0.0
      %1920 = vmatmul.mubr.f32.gmra.mxu0 %v1702
      %v1921 = vpop.f32.mrf.mxu0
      %v1922 = vadd.f32 %v1578, %v1921
      %v1923 = vpop.f32.mrf.mxu0
      %1924 = vmatprep.mubr.f32.mxu0 0.0
      %1925 = vmatmul.mubr.f32.gmra.mxu0 %v1705
      %v1926 = vpop.f32.mrf.mxu0
      %v1927 = vadd.f32 %v1580, %v1926
      %v1928 = vpop.f32.mrf.mxu0
      %1929 = vmatprep.mubr.f32.mxu0 0.0
      %1930 = vmatmul.mubr.f32.gmra.mxu0 %v1708
      %v1931 = vpop.f32.mrf.mxu0
      %v1932 = vadd.f32 %v1582, %v1931
      %v1933 = vpop.f32.mrf.mxu0
      %1934 = vmatprep.mubr.f32.mxu0 0.0
      %1935 = vmatmul.mubr.f32.gmra.mxu0 %v1711
      %v1936 = vpop.f32.mrf.mxu0
      %v1937 = vadd.f32 %v1584, %v1936
      %v1938 = vpop.f32.mrf.mxu0
      %1939 = vmatprep.mubr.f32.mxu0 0.0
      %1940 = vmatmul.mubr.f32.gmra.mxu0 %v1714
      %v1941 = vpop.f32.mrf.mxu0
      %v1942 = vadd.f32 %v1586, %v1941
      %v1943 = vpop.f32.mrf.mxu0
      %1944 = vdwg.mxu0
      %v1945 = vld [vmem:[%s5] sm:$0x1]
      %v1947 = vlaneseq
      %v1948 = vshrl.u32 %v1947, 7
      %v1949 = vsub.s32 0, %v1948
      %v1950 = vrot.slane %v1945, %v1949
      %v1952 = vadd.f32 %v1787, %v1950
      %v1953 = vadd.f32 %v1792, %v1950
      %v1954 = vadd.f32 %v1797, %v1950
      %v1955 = vadd.f32 %v1802, %v1950
      %v1956 = vadd.f32 %v1807, %v1950
      %v1957 = vadd.f32 %v1812, %v1950
      %v1958 = vadd.f32 %v1817, %v1950
      %v1959 = vadd.f32 %v1822, %v1950
      %v1960 = vadd.f32 %v1827, %v1950
      %v1961 = vadd.f32 %v1832, %v1950
      %v1962 = vadd.f32 %v1837, %v1950
      %v1963 = vadd.f32 %v1842, %v1950
      %v1964 = vadd.f32 %v1847, %v1950
      %v1965 = vadd.f32 %v1852, %v1950
      %v1966 = vadd.f32 %v1857, %v1950
      %v1967 = vadd.f32 %v1862, %v1950
      %v1968 = vadd.f32 %v1867, %v1950
      %v1969 = vadd.f32 %v1872, %v1950
      %v1970 = vadd.f32 %v1877, %v1950
      %v1971 = vadd.f32 %v1882, %v1950
      %v1972 = vadd.f32 %v1887, %v1950
      %v1973 = vadd.f32 %v1892, %v1950
      %v1974 = vadd.f32 %v1897, %v1950
      %v1975 = vadd.f32 %v1902, %v1950
      %v1976 = vadd.f32 %v1907, %v1950
      %v1977 = vadd.f32 %v1912, %v1950
      %v1978 = vadd.f32 %v1917, %v1950
      %v1979 = vadd.f32 %v1922, %v1950
      %v1980 = vadd.f32 %v1927, %v1950
      %v1981 = vadd.f32 %v1932, %v1950
      %v1982 = vadd.f32 %v1937, %v1950
      %v1983 = vadd.f32 %v1942, %v1950
      %v1984 = vpack.c.bf16 %v1953, %v1952
      %v1985 = vpack.c.bf16 %v1955, %v1954
      %v1986 = vpack.c.bf16 %v1957, %v1956
      %v1987 = vpack.c.bf16 %v1959, %v1958
      %v1988 = vpack.c.bf16 %v1961, %v1960
      %v1989 = vpack.c.bf16 %v1963, %v1962
      %v1990 = vpack.c.bf16 %v1965, %v1964
      %v1991 = vpack.c.bf16 %v1967, %v1966
      %v1992 = vpack.c.bf16 %v1969, %v1968
      %v1993 = vpack.c.bf16 %v1971, %v1970
      %v1994 = vpack.c.bf16 %v1973, %v1972
      %v1995 = vpack.c.bf16 %v1975, %v1974
      %v1996 = vpack.c.bf16 %v1977, %v1976
      %v1997 = vpack.c.bf16 %v1979, %v1978
      %v1998 = vpack.c.bf16 %v1981, %v1980
      %v1999 = vpack.c.bf16 %v1983, %v1982
      %v2016 = vunpack.c.l.b16 %v1984
      %v2017 = vunpack.c.h.b16 %v1984
      %v2018 = vunpack.c.l.b16 %v1985
      %v2019 = vunpack.c.h.b16 %v1985
      %v2020 = vunpack.c.l.b16 %v1986
      %v2021 = vunpack.c.h.b16 %v1986
      %v2022 = vunpack.c.l.b16 %v1987
      %v2023 = vunpack.c.h.b16 %v1987
      %v2024 = vunpack.c.l.b16 %v1988
      %v2025 = vunpack.c.h.b16 %v1988
      %v2026 = vunpack.c.l.b16 %v1989
      %v2027 = vunpack.c.h.b16 %v1989
      %v2028 = vunpack.c.l.b16 %v1990
      %v2029 = vunpack.c.h.b16 %v1990
      %v2030 = vunpack.c.l.b16 %v1991
      %v2031 = vunpack.c.h.b16 %v1991
      %v2032 = vunpack.c.l.b16 %v1992
      %v2033 = vunpack.c.h.b16 %v1992
      %v2034 = vunpack.c.l.b16 %v1993
      %v2035 = vunpack.c.h.b16 %v1993
      %v2036 = vunpack.c.l.b16 %v1994
      %v2037 = vunpack.c.h.b16 %v1994
      %v2038 = vunpack.c.l.b16 %v1995
      %v2039 = vunpack.c.h.b16 %v1995
      %v2040 = vunpack.c.l.b16 %v1996
      %v2041 = vunpack.c.h.b16 %v1996
      %v2042 = vunpack.c.l.b16 %v1997
      %v2043 = vunpack.c.h.b16 %v1997
      %v2044 = vunpack.c.l.b16 %v1998
      %v2045 = vunpack.c.h.b16 %v1998
      %v2046 = vunpack.c.l.b16 %v1999
      %v2047 = vunpack.c.h.b16 %v1999
      %v2048 = vpack.c.b16 %v2016, %v2016
      %v2049 = vpack.c.b16 %v2017, %v2017
      %v2050 = vpack.c.b16 %v2018, %v2018
      %v2051 = vpack.c.b16 %v2019, %v2019
      %v2052 = vpack.c.b16 %v2020, %v2020
      %v2053 = vpack.c.b16 %v2021, %v2021
      %v2054 = vpack.c.b16 %v2022, %v2022
      %v2055 = vpack.c.b16 %v2023, %v2023
      %v2056 = vpack.c.b16 %v2024, %v2024
      %v2057 = vpack.c.b16 %v2025, %v2025
      %v2058 = vpack.c.b16 %v2026, %v2026
      %v2059 = vpack.c.b16 %v2027, %v2027
      %v2060 = vpack.c.b16 %v2028, %v2028
      %v2061 = vpack.c.b16 %v2029, %v2029
      %v2062 = vpack.c.b16 %v2030, %v2030
      %v2063 = vpack.c.b16 %v2031, %v2031
      %v2064 = vpack.c.b16 %v2032, %v2032
      %v2065 = vpack.c.b16 %v2033, %v2033
      %v2066 = vpack.c.b16 %v2034, %v2034
      %v2067 = vpack.c.b16 %v2035, %v2035
      %v2068 = vpack.c.b16 %v2036, %v2036
      %v2069 = vpack.c.b16 %v2037, %v2037
      %v2070 = vpack.c.b16 %v2038, %v2038
      %v2071 = vpack.c.b16 %v2039, %v2039
      %v2072 = vpack.c.b16 %v2040, %v2040
      %v2073 = vpack.c.b16 %v2041, %v2041
      %v2074 = vpack.c.b16 %v2042, %v2042
      %v2075 = vpack.c.b16 %v2043, %v2043
      %v2076 = vpack.c.b16 %v2044, %v2044
      %v2077 = vpack.c.b16 %v2045, %v2045
      %v2078 = vpack.c.b16 %v2046, %v2046
      %v2079 = vpack.c.b16 %v2047, %v2047
      %vm2112 = vcmask 519168
      %2113 = vst.msk [vmem:[%s275] sm:$0xf] %vm2112, %v2048
      %2114 = vst.msk [vmem:[%s275 + $0x4] sm:$0xf] %vm2112, %v2049
      %2115 = vst.msk [vmem:[%s275 + $0x8] sm:$0xf] %vm2112, %v2050
      %2116 = vst.msk [vmem:[%s275 + $0xc] sm:$0xf] %vm2112, %v2051
      %2117 = vst.msk [vmem:[%s275 + $0x10] sm:$0xf] %vm2112, %v2052
      %2118 = vst.msk [vmem:[%s275 + $0x14] sm:$0xf] %vm2112, %v2053
      %2119 = vst.msk [vmem:[%s275 + $0x18] sm:$0xf] %vm2112, %v2054
      %2120 = vst.msk [vmem:[%s275 + $0x1c] sm:$0xf] %vm2112, %v2055
      %2121 = vst.msk [vmem:[%s275 + $0x20] sm:$0xf] %vm2112, %v2056
      %2122 = vst.msk [vmem:[%s275 + $0x24] sm:$0xf] %vm2112, %v2057
      %2123 = vst.msk [vmem:[%s275 + $0x28] sm:$0xf] %vm2112, %v2058
      %2124 = vst.msk [vmem:[%s275 + $0x2c] sm:$0xf] %vm2112, %v2059
      %2125 = vst.msk [vmem:[%s275 + $0x30] sm:$0xf] %vm2112, %v2060
      %2126 = vst.msk [vmem:[%s275 + $0x34] sm:$0xf] %vm2112, %v2061
      %2127 = vst.msk [vmem:[%s275 + $0x38] sm:$0xf] %vm2112, %v2062
      %2128 = vst.msk [vmem:[%s275 + $0x3c] sm:$0xf] %vm2112, %v2063
      %2129 = vst.msk [vmem:[%s275 + $0x40] sm:$0xf] %vm2112, %v2064
      %2130 = vst.msk [vmem:[%s275 + $0x44] sm:$0xf] %vm2112, %v2065
      %2131 = vst.msk [vmem:[%s275 + $0x48] sm:$0xf] %vm2112, %v2066
      %2132 = vst.msk [vmem:[%s275 + $0x4c] sm:$0xf] %vm2112, %v2067
      %2133 = vst.msk [vmem:[%s275 + $0x50] sm:$0xf] %vm2112, %v2068
      %2134 = vst.msk [vmem:[%s275 + $0x54] sm:$0xf] %vm2112, %v2069
      %2135 = vst.msk [vmem:[%s275 + $0x58] sm:$0xf] %vm2112, %v2070
      %2136 = vst.msk [vmem:[%s275 + $0x5c] sm:$0xf] %vm2112, %v2071
      %2137 = vst.msk [vmem:[%s275 + $0x60] sm:$0xf] %vm2112, %v2072
      %2138 = vst.msk [vmem:[%s275 + $0x64] sm:$0xf] %vm2112, %v2073
      %2139 = vst.msk [vmem:[%s275 + $0x68] sm:$0xf] %vm2112, %v2074
      %2140 = vst.msk [vmem:[%s275 + $0x6c] sm:$0xf] %vm2112, %v2075
      %2141 = vst.msk [vmem:[%s275 + $0x70] sm:$0xf] %vm2112, %v2076
      %2142 = vst.msk [vmem:[%s275 + $0x74] sm:$0xf] %vm2112, %v2077
      %2143 = vst.msk [vmem:[%s275 + $0x78] sm:$0xf] %vm2112, %v2078
      %2144 = vst.msk [vmem:[%s275 + $0x7c] sm:$0xf] %vm2112, %v2079
      %s2145 = smul.u32 32, %s17
      %p2146 = scmp.lt.s32.totalorder %s2145, 63
      %s2147 = scalar_select %p2146, %s2145, 63
      %s2148 = smul.addr %s2147, 4
      %s2149 = scalar_lea.vmem %s6, %s2148
      // Predicated region
      $region45: #{tpu_custom_call.1} parent=43 // pred_check
        %p2150 = pneg %p171
      $region46: #{tpu_custom_call.1} parent=43 // pred_check_branch
        %2152 = sbr.rel (%p2150) target = $region48
      $region47: #{tpu_custom_call.1} parent=43 // pred_region
        %s2153 = smul.u32 32, %s17
      $region48: #{tpu_custom_call.1} parent=43 // pred_fallthru
        _
    $region44: #{tpu_custom_call.1} parent=5 // pred_fallthru
      _
    %p2154 = scmp.le.s32.totalorder 2, %s12
    // Predicated region
    $region49: #{tpu_custom_call.1} parent=5 // pred_check
      %p2155 = pneg %p2154
    $region50: #{tpu_custom_call.1} parent=5 // pred_check_branch
      %2157 = sbr.rel (%p2155) target = $region52
    $region51: #{tpu_custom_call.1} parent=5 // pred_region
      %s2158 = ssub.s32 %s12, 2
      // Predicated region
      $region53: #{tpu_custom_call.1} parent=51 // pred_check
        %p2159 = pneg %p177
      $region54: #{tpu_custom_call.1} parent=51 // pred_check_branch
        %2161 = sbr.rel (%p2159) target = $region56
      $region55: #{tpu_custom_call.1} parent=51 // pred_region
        %s2162 = smul.u32 32, %s18
        %p2163 = scmp.lt.s32.totalorder %s2162, 63
        %s2164 = scalar_select %p2163, %s2162, 63
        %s2165 = smul.addr %s2164, 4
        %s2166 = scalar_lea.vmem %s6, %s2165
      $region56: #{tpu_custom_call.1} parent=51 // pred_fallthru
        _
    $region52: #{tpu_custom_call.1} parent=5 // pred_fallthru
      _
  $region6: #{tpu_custom_call.1} parent=0 // loop_footer
    %s16 = sadd.s32 1, %s12
  $region7: #{tpu_custom_call.1} parent=0 // loop_footer_branch
    %11 = sbr.rel target = $region3
  $region8: #{tpu_custom_call.1} parent=0 // loop_exit
    _

</llo_original>
